<compile_context>
chip_gen: v5e
topology: v5e:2x2
jax: 0.10.0
libtpu: 0.0.40
codegen_flags: <defaults>
</compile_context>

<pallas_src>
import numpy as np

import jax
import jax.numpy as jnp
from jax.experimental import pallas as pl
from jax.experimental.pallas import tpu as pltpu


def _horizontal_masks(H, W, K, pad):
    """0/1 lane masks (one per kw tap): valid iff 0 <= w + dw < W.

    Vertical out-of-bounds taps are already zeroed by the slice + zero-fill
    lane shift, so only the horizontal direction needs masking.
    """
    HW = H * W
    w_coord = np.arange(HW, dtype=np.int64) % W
    m = np.ones((K, HW), dtype=np.float32)
    for kw in range(K):
        dw = kw - pad
        m[kw] = ((w_coord + dw >= 0) & (w_coord + dw < W)).astype(np.float32)
    return m


def _make_dense_kernel(H, W, Cin, Cg, K, pad, B):
    """Build the per-grid-step kernel body (static shapes captured)."""
    HW = H * W

    def _shift_lanes(x2d, d):
        # y[:, p] = x2d[:, p + d] if 0 <= p + d < HW else 0  (flat spatial shift)
        if d == 0:
            return x2d
        rows = x2d.shape[0]
        fill = jnp.zeros((rows, abs(d)), dtype=x2d.dtype)
        if d > 0:
            return jnp.concatenate([x2d[:, d:], fill], axis=1)
        return jnp.concatenate([fill, x2d[:, :HW + d]], axis=1)

    def kernel(x_ref, w_ref, mask_ref, out_ref):
        # x_ref    : (B, Cin, HW)        B images per grid step, spatial on lanes
        # w_ref    : (Cg, K*K*Cin + 1)   tap-major/channel-minor weights + bias column
        # mask_ref : (K, HW)             0/1 horizontal boundary masks (constant)
        # out_ref  : (B, Cin + Cg, HW)   [x | relu(conv(x))] along channels
        w = w_ref[...].astype(jnp.float32)                     # hoisted, shared by all B
        masks = mask_ref[...]                                  # (K, HW) f32
        mask_rows = [masks[kw:kw + 1, :] for kw in range(K)]   # (1, HW) each, hoisted
        ones_row = jnp.ones((1, HW), dtype=jnp.float32)        # bias row of the im2col

        for b in range(B):                                     # static unroll over images
            x_b = x_ref[b].astype(jnp.float32)                 # (Cin, HW)

            # Build the (K*K*Cin + 1, HW) im2col operand in registers:
            # 9 spatially shifted copies of x_b (zero-filled at image borders)
            # plus a ones row that carries the bias through the matmul.
            taps = []
            for kh in range(K):
                dh = kh - pad
                for kw in range(K):
                    dw = kw - pad
                    shifted = _shift_lanes(x_b, dh * W + dw)
                    if dw != 0:                                # vertical OOB already zeroed
                        shifted = shifted * mask_rows[kw]
                    taps.append(shifted)
            taps.append(ones_row)
            col = jnp.concatenate(taps, axis=0)                # (K*K*Cin + 1, HW)

            # One MXU matmul per image: (Cg, 37) @ (37, HW) -> (Cg, HW), f32 acc.
            acc = jnp.dot(w, col, preferred_element_type=jnp.float32,
                          precision=jax.lax.Precision.HIGHEST)
            conv_b = jnp.maximum(acc, 0.0)                     # ReLU

            # Channel concat + single fused, sublane-aligned store of this image.
            out_ref[b] = jnp.concatenate([x_b, conv_b], axis=0).astype(out_ref.dtype)

    return kernel


def make_dense_forward(x_nchw, weight, bias, *, max_images_per_step=8):
    """MakeDense forward.

    x_nchw: (N, Cin, H, W); weight: (Cg, Cin, K, K); bias: (Cg,)
    Returns (N, Cin + Cg, H, W), matching torch.cat((x, relu(conv(x))), dim=1).
    """
    N, Cin, H, W = x_nchw.shape
    Cg, Cin_w, K, K2 = weight.shape
    assert Cin_w == Cin and K == K2 and K % 2 == 1, "expects Conv2d(Cin->Cg, odd k, same pad)"
    pad = (K - 1) // 2
    HW = H * W
    Cout = Cin + Cg

    # Images per grid step: largest divisor of N <= max_images_per_step, preferring
    # one that still leaves >= 2 grid steps so v7x megacore ("parallel") can shard
    # the grid across both TensorCores. Per-step VMEM stays ~0.13 MiB * B, so no
    # vmem_limit_bytes override is needed on v5e/v6e/v7x at these sizes.
    divs = [d for d in range(1, N + 1) if N % d == 0 and d <= max_images_per_step]
    two_step = [d for d in divs if N // d >= 2]
    B = max(two_step) if two_step else max(divs)

    # Wrapper glue (tiny): flatten spatial; tap-major/channel-minor weights + bias column.
    x_flat = x_nchw.reshape(N, Cin, HW)
    w_mat = jnp.concatenate(
        [jnp.transpose(weight, (0, 2, 3, 1)).reshape(Cg, K * K * Cin).astype(jnp.float32),
         bias.reshape(Cg, 1).astype(jnp.float32)],
        axis=1)                                                  # (Cg, K*K*Cin + 1)
    masks = jnp.asarray(_horizontal_masks(H, W, K, pad))         # (K, HW) f32, constant

    kernel = _make_dense_kernel(H, W, Cin, Cg, K, pad, B)

    out_flat = pl.pallas_call(
        kernel,
        out_shape=jax.ShapeDtypeStruct((N, Cout, HW), x_nchw.dtype),
        grid_spec=pltpu.PrefetchScalarGridSpec(
            num_scalar_prefetch=0,
            grid=(N // B,),
            in_specs=[
                pl.BlockSpec((B, Cin, HW), lambda n: (n, 0, 0)),        # B images / step
                pl.BlockSpec((Cg, K * K * Cin + 1), lambda n: (0, 0)),  # weights+bias (fetched once)
                pl.BlockSpec((K, HW), lambda n: (0, 0)),                # masks (fetched once)
            ],
            out_specs=pl.BlockSpec((B, Cout, HW), lambda n: (n, 0, 0)),
        ),
        compiler_params=pltpu.CompilerParams(
            dimension_semantics=("parallel",)),
    )(x_flat, w_mat, masks)

    return out_flat.reshape(N, Cout, H, W)


def _reference_forward(x_nchw, weight, bias):
    """Pure-JAX reference matching F.relu(conv2d(x)); cat along channels."""
    conv = jax.lax.conv_general_dilated(
        x_nchw, weight,
        window_strides=(1, 1), padding="SAME",
        dimension_numbers=("NCHW", "OIHW", "NCHW"),
        precision=jax.lax.Precision.HIGHEST,
    ) + bias.reshape(1, -1, 1, 1)
    return jnp.concatenate([x_nchw, jnp.maximum(conv, 0.0)], axis=1)


if __name__ == "__main__":
    # Small shapes consistent with the module; N=4 so the demo exercises both the
    # image-batched block (B=2 images per grid step) and a 2-step "parallel" grid.
    N, Cin, H, W = 4, 4, 16, 16
    Cg, K = 8, 3

    key = jax.random.PRNGKey(0)
    kx, kw, kb = jax.random.split(key, 3)
    x = jax.random.normal(kx, (N, Cin, H, W), dtype=jnp.float32)
    # Deterministic synthetic parameters (Conv2d(Cin, Cg, k=3) shapes).
    weight = 0.1 * jax.random.normal(kw, (Cg, Cin, K, K), dtype=jnp.float32)
    bias = 0.1 * jax.random.normal(kb, (Cg,), dtype=jnp.float32)

    out = jax.block_until_ready(make_dense_forward(x, weight, bias))
    ref = _reference_forward(x, weight, bias)

    assert out.shape == (N, Cin + Cg, H, W), out.shape
    assert jnp.allclose(out, ref, rtol=1e-3, atol=1e-3), "mismatch vs reference"

    print("KERNEL_OK")
</pallas_src>

<mosaic_0001>
module attributes {stable_mosaic.version = 11 : i64} {
  func.func @kernel(%arg0: i32, %arg1: memref<2x4x256xf32, #tpu.memory_space<vmem>>, %arg2: memref<8x37xf32, #tpu.memory_space<vmem>>, %arg3: memref<3x256xf32, #tpu.memory_space<vmem>>, %arg4: memref<2x12x256xf32, #tpu.memory_space<vmem>>) attributes {dimension_semantics = [#tpu.dimension_semantics<parallel>], iteration_bounds = array<i64: 2>, scalar_prefetch = 0 : i64, scratch_operands = 0 : i64, tpu.core_type = #tpu.core_type<tc>, window_params = [{transform_indices = @transform_0, window_bounds = array<i64: 2, 4, 256>}, {pipeline_mode = #tpu.pipeline_mode<synchronous>, transform_indices = @transform_1, window_bounds = array<i64: 8, 37>}, {pipeline_mode = #tpu.pipeline_mode<synchronous>, transform_indices = @transform_2, window_bounds = array<i64: 3, 256>}, {transform_indices = @transform_3, window_bounds = array<i64: 2, 12, 256>}]} {
    %c0 = arith.constant 0 : index
    %c0_0 = arith.constant 0 : index
    %0 = vector.load %arg2[%c0, %c0_0] : memref<8x37xf32, #tpu.memory_space<vmem>>, vector<8x37xf32>
    %c0_1 = arith.constant 0 : index
    %c0_2 = arith.constant 0 : index
    %1 = vector.load %arg3[%c0_1, %c0_2] : memref<3x256xf32, #tpu.memory_space<vmem>>, vector<3x256xf32>
    %2 = vector.extract_strided_slice %1 {offsets = [0, 0], sizes = [1, 256], strides = [1, 1]} : vector<3x256xf32> to vector<1x256xf32>
    %3 = vector.extract_strided_slice %1 {offsets = [2, 0], sizes = [1, 256], strides = [1, 1]} : vector<3x256xf32> to vector<1x256xf32>
    %cst = arith.constant 1.000000e+00 : f32
    %4 = vector.broadcast %cst : f32 to vector<1x256xf32>
    %c0_3 = arith.constant 0 : index
    %c0_4 = arith.constant 0 : index
    %c0_5 = arith.constant 0 : index
    %5 = vector.load %arg1[%c0_3, %c0_4, %c0_5] : memref<2x4x256xf32, #tpu.memory_space<vmem>>, vector<1x4x256xf32>
    %6 = vector.shape_cast %5 : vector<1x4x256xf32> to vector<4x256xf32>
    %cst_6 = arith.constant 0.000000e+00 : f32
    %7 = vector.broadcast %cst_6 : f32 to vector<4x17xf32>
    %8 = vector.extract_strided_slice %6 {offsets = [0, 0], sizes = [4, 239], strides = [1, 1]} : vector<4x256xf32> to vector<4x239xf32>
    %9 = tpu.concatenate %7, %8 in 1 : vector<4x17xf32>, vector<4x239xf32> -> vector<4x256xf32>
    %10 = vector.broadcast %2 : vector<1x256xf32> to vector<4x256xf32>
    %11 = arith.mulf %9, %10 : vector<4x256xf32>
    %cst_7 = arith.constant 0.000000e+00 : f32
    %12 = vector.broadcast %cst_7 : f32 to vector<4x16xf32>
    %13 = vector.extract_strided_slice %6 {offsets = [0, 0], sizes = [4, 240], strides = [1, 1]} : vector<4x256xf32> to vector<4x240xf32>
    %14 = tpu.concatenate %12, %13 in 1 : vector<4x16xf32>, vector<4x240xf32> -> vector<4x256xf32>
    %cst_8 = arith.constant 0.000000e+00 : f32
    %15 = vector.broadcast %cst_8 : f32 to vector<4x15xf32>
    %16 = vector.extract_strided_slice %6 {offsets = [0, 0], sizes = [4, 241], strides = [1, 1]} : vector<4x256xf32> to vector<4x241xf32>
    %17 = tpu.concatenate %15, %16 in 1 : vector<4x15xf32>, vector<4x241xf32> -> vector<4x256xf32>
    %18 = vector.broadcast %3 : vector<1x256xf32> to vector<4x256xf32>
    %19 = arith.mulf %17, %18 : vector<4x256xf32>
    %cst_9 = arith.constant 0.000000e+00 : f32
    %20 = vector.broadcast %cst_9 : f32 to vector<4x1xf32>
    %21 = vector.extract_strided_slice %6 {offsets = [0, 0], sizes = [4, 255], strides = [1, 1]} : vector<4x256xf32> to vector<4x255xf32>
    %22 = tpu.concatenate %20, %21 in 1 : vector<4x1xf32>, vector<4x255xf32> -> vector<4x256xf32>
    %23 = vector.broadcast %2 : vector<1x256xf32> to vector<4x256xf32>
    %24 = arith.mulf %22, %23 : vector<4x256xf32>
    %cst_10 = arith.constant 0.000000e+00 : f32
    %25 = vector.broadcast %cst_10 : f32 to vector<4x1xf32>
    %26 = vector.extract_strided_slice %6 {offsets = [0, 1], sizes = [4, 255], strides = [1, 1]} : vector<4x256xf32> to vector<4x255xf32>
    %27 = tpu.concatenate %26, %25 in 1 : vector<4x255xf32>, vector<4x1xf32> -> vector<4x256xf32>
    %28 = vector.broadcast %3 : vector<1x256xf32> to vector<4x256xf32>
    %29 = arith.mulf %27, %28 : vector<4x256xf32>
    %cst_11 = arith.constant 0.000000e+00 : f32
    %30 = vector.broadcast %cst_11 : f32 to vector<4x15xf32>
    %31 = vector.extract_strided_slice %6 {offsets = [0, 15], sizes = [4, 241], strides = [1, 1]} : vector<4x256xf32> to vector<4x241xf32>
    %32 = tpu.concatenate %31, %30 in 1 : vector<4x241xf32>, vector<4x15xf32> -> vector<4x256xf32>
    %33 = vector.broadcast %2 : vector<1x256xf32> to vector<4x256xf32>
    %34 = arith.mulf %32, %33 : vector<4x256xf32>
    %cst_12 = arith.constant 0.000000e+00 : f32
    %35 = vector.broadcast %cst_12 : f32 to vector<4x16xf32>
    %36 = vector.extract_strided_slice %6 {offsets = [0, 16], sizes = [4, 240], strides = [1, 1]} : vector<4x256xf32> to vector<4x240xf32>
    %37 = tpu.concatenate %36, %35 in 1 : vector<4x240xf32>, vector<4x16xf32> -> vector<4x256xf32>
    %cst_13 = arith.constant 0.000000e+00 : f32
    %38 = vector.broadcast %cst_13 : f32 to vector<4x17xf32>
    %39 = vector.extract_strided_slice %6 {offsets = [0, 17], sizes = [4, 239], strides = [1, 1]} : vector<4x256xf32> to vector<4x239xf32>
    %40 = tpu.concatenate %39, %38 in 1 : vector<4x239xf32>, vector<4x17xf32> -> vector<4x256xf32>
    %41 = vector.broadcast %3 : vector<1x256xf32> to vector<4x256xf32>
    %42 = arith.mulf %40, %41 : vector<4x256xf32>
    %43 = tpu.concatenate %11, %14, %19, %24, %6, %29, %34, %37, %42, %4 in 0 : vector<4x256xf32>, vector<4x256xf32>, vector<4x256xf32>, vector<4x256xf32>, vector<4x256xf32>, vector<4x256xf32>, vector<4x256xf32>, vector<4x256xf32>, vector<4x256xf32>, vector<1x256xf32> -> vector<37x256xf32>
    %cst_14 = arith.constant dense<0.000000e+00> : vector<8x256xf32>
    %44 = tpu.matmul %0, %43, %cst_14 {dimension_numbers = #tpu.dot_dimension_numbers<[1], [0], [0], [1], [0, 0, 1, 1], [], []>, precision = #tpu.contract_precision<fp32>} : vector<8x37xf32>, vector<37x256xf32>, vector<8x256xf32> -> vector<8x256xf32>
    %cst_15 = arith.constant 0.000000e+00 : f32
    %45 = vector.broadcast %cst_15 : f32 to vector<8x256xf32>
    %46 = arith.maximumf %44, %45 : vector<8x256xf32>
    %47 = tpu.concatenate %6, %46 in 0 : vector<4x256xf32>, vector<8x256xf32> -> vector<12x256xf32>
    %c0_16 = arith.constant 0 : index
    %c0_17 = arith.constant 0 : index
    %c0_18 = arith.constant 0 : index
    %48 = vector.load %arg4[%c0_16, %c0_17, %c0_18] : memref<2x12x256xf32, #tpu.memory_space<vmem>>, vector<1x12x256xf32>
    %49 = vector.shape_cast %48 : vector<1x12x256xf32> to vector<12x256xf32>
    %50 = vector.shape_cast %47 : vector<12x256xf32> to vector<1x12x256xf32>
    tpu.vector_store %arg4[%c0_16, %c0_17, %c0_18], %50 {strides = array<i32>} : memref<2x12x256xf32, #tpu.memory_space<vmem>>, vector<1x12x256xf32>,
    %c1 = arith.constant 1 : index
    %c0_19 = arith.constant 0 : index
    %c0_20 = arith.constant 0 : index
    %51 = vector.load %arg1[%c1, %c0_19, %c0_20] : memref<2x4x256xf32, #tpu.memory_space<vmem>>, vector<1x4x256xf32>
    %52 = vector.shape_cast %51 : vector<1x4x256xf32> to vector<4x256xf32>
    %cst_21 = arith.constant 0.000000e+00 : f32
    %53 = vector.broadcast %cst_21 : f32 to vector<4x17xf32>
    %54 = vector.extract_strided_slice %52 {offsets = [0, 0], sizes = [4, 239], strides = [1, 1]} : vector<4x256xf32> to vector<4x239xf32>
    %55 = tpu.concatenate %53, %54 in 1 : vector<4x17xf32>, vector<4x239xf32> -> vector<4x256xf32>
    %56 = vector.broadcast %2 : vector<1x256xf32> to vector<4x256xf32>
    %57 = arith.mulf %55, %56 : vector<4x256xf32>
    %cst_22 = arith.constant 0.000000e+00 : f32
    %58 = vector.broadcast %cst_22 : f32 to vector<4x16xf32>
    %59 = vector.extract_strided_slice %52 {offsets = [0, 0], sizes = [4, 240], strides = [1, 1]} : vector<4x256xf32> to vector<4x240xf32>
    %60 = tpu.concatenate %58, %59 in 1 : vector<4x16xf32>, vector<4x240xf32> -> vector<4x256xf32>
    %cst_23 = arith.constant 0.000000e+00 : f32
    %61 = vector.broadcast %cst_23 : f32 to vector<4x15xf32>
    %62 = vector.extract_strided_slice %52 {offsets = [0, 0], sizes = [4, 241], strides = [1, 1]} : vector<4x256xf32> to vector<4x241xf32>
    %63 = tpu.concatenate %61, %62 in 1 : vector<4x15xf32>, vector<4x241xf32> -> vector<4x256xf32>
    %64 = vector.broadcast %3 : vector<1x256xf32> to vector<4x256xf32>
    %65 = arith.mulf %63, %64 : vector<4x256xf32>
    %cst_24 = arith.constant 0.000000e+00 : f32
    %66 = vector.broadcast %cst_24 : f32 to vector<4x1xf32>
    %67 = vector.extract_strided_slice %52 {offsets = [0, 0], sizes = [4, 255], strides = [1, 1]} : vector<4x256xf32> to vector<4x255xf32>
    %68 = tpu.concatenate %66, %67 in 1 : vector<4x1xf32>, vector<4x255xf32> -> vector<4x256xf32>
    %69 = vector.broadcast %2 : vector<1x256xf32> to vector<4x256xf32>
    %70 = arith.mulf %68, %69 : vector<4x256xf32>
    %cst_25 = arith.constant 0.000000e+00 : f32
    %71 = vector.broadcast %cst_25 : f32 to vector<4x1xf32>
    %72 = vector.extract_strided_slice %52 {offsets = [0, 1], sizes = [4, 255], strides = [1, 1]} : vector<4x256xf32> to vector<4x255xf32>
    %73 = tpu.concatenate %72, %71 in 1 : vector<4x255xf32>, vector<4x1xf32> -> vector<4x256xf32>
    %74 = vector.broadcast %3 : vector<1x256xf32> to vector<4x256xf32>
    %75 = arith.mulf %73, %74 : vector<4x256xf32>
    %cst_26 = arith.constant 0.000000e+00 : f32
    %76 = vector.broadcast %cst_26 : f32 to vector<4x15xf32>
    %77 = vector.extract_strided_slice %52 {offsets = [0, 15], sizes = [4, 241], strides = [1, 1]} : vector<4x256xf32> to vector<4x241xf32>
    %78 = tpu.concatenate %77, %76 in 1 : vector<4x241xf32>, vector<4x15xf32> -> vector<4x256xf32>
    %79 = vector.broadcast %2 : vector<1x256xf32> to vector<4x256xf32>
    %80 = arith.mulf %78, %79 : vector<4x256xf32>
    %cst_27 = arith.constant 0.000000e+00 : f32
    %81 = vector.broadcast %cst_27 : f32 to vector<4x16xf32>
    %82 = vector.extract_strided_slice %52 {offsets = [0, 16], sizes = [4, 240], strides = [1, 1]} : vector<4x256xf32> to vector<4x240xf32>
    %83 = tpu.concatenate %82, %81 in 1 : vector<4x240xf32>, vector<4x16xf32> -> vector<4x256xf32>
    %cst_28 = arith.constant 0.000000e+00 : f32
    %84 = vector.broadcast %cst_28 : f32 to vector<4x17xf32>
    %85 = vector.extract_strided_slice %52 {offsets = [0, 17], sizes = [4, 239], strides = [1, 1]} : vector<4x256xf32> to vector<4x239xf32>
    %86 = tpu.concatenate %85, %84 in 1 : vector<4x239xf32>, vector<4x17xf32> -> vector<4x256xf32>
    %87 = vector.broadcast %3 : vector<1x256xf32> to vector<4x256xf32>
    %88 = arith.mulf %86, %87 : vector<4x256xf32>
    %89 = tpu.concatenate %57, %60, %65, %70, %52, %75, %80, %83, %88, %4 in 0 : vector<4x256xf32>, vector<4x256xf32>, vector<4x256xf32>, vector<4x256xf32>, vector<4x256xf32>, vector<4x256xf32>, vector<4x256xf32>, vector<4x256xf32>, vector<4x256xf32>, vector<1x256xf32> -> vector<37x256xf32>
    %cst_29 = arith.constant dense<0.000000e+00> : vector<8x256xf32>
    %90 = tpu.matmul %0, %89, %cst_29 {dimension_numbers = #tpu.dot_dimension_numbers<[1], [0], [0], [1], [0, 0, 1, 1], [], []>, precision = #tpu.contract_precision<fp32>} : vector<8x37xf32>, vector<37x256xf32>, vector<8x256xf32> -> vector<8x256xf32>
    %cst_30 = arith.constant 0.000000e+00 : f32
    %91 = vector.broadcast %cst_30 : f32 to vector<8x256xf32>
    %92 = arith.maximumf %90, %91 : vector<8x256xf32>
    %93 = tpu.concatenate %52, %92 in 0 : vector<4x256xf32>, vector<8x256xf32> -> vector<12x256xf32>
    %c1_31 = arith.constant 1 : index
    %c0_32 = arith.constant 0 : index
    %c0_33 = arith.constant 0 : index
    %94 = vector.load %arg4[%c1_31, %c0_32, %c0_33] : memref<2x12x256xf32, #tpu.memory_space<vmem>>, vector<1x12x256xf32>
    %95 = vector.shape_cast %94 : vector<1x12x256xf32> to vector<12x256xf32>
    %96 = vector.shape_cast %93 : vector<12x256xf32> to vector<1x12x256xf32>
    tpu.vector_store %arg4[%c1_31, %c0_32, %c0_33], %96 {strides = array<i32>} : memref<2x12x256xf32, #tpu.memory_space<vmem>>, vector<1x12x256xf32>,
    return
  }
  func.func @transform_0(%arg0: i32) -> (i32, i32, i32) {
    %c0_i32 = arith.constant 0 : i32
    %c0_i32_0 = arith.constant 0 : i32
    %c0_i32_1 = arith.constant 0 : i32
    return %arg0, %c0_i32, %c0_i32_0 : i32, i32, i32
  }
  func.func @transform_1(%arg0: i32) -> (i32, i32) {
    %c0_i32 = arith.constant 0 : i32
    %c0_i32_0 = arith.constant 0 : i32
    %c0_i32_1 = arith.constant 0 : i32
    return %c0_i32, %c0_i32_0 : i32, i32
  }
  func.func @transform_2(%arg0: i32) -> (i32, i32) {
    %c0_i32 = arith.constant 0 : i32
    %c0_i32_0 = arith.constant 0 : i32
    %c0_i32_1 = arith.constant 0 : i32
    return %c0_i32, %c0_i32_0 : i32, i32
  }
  func.func @transform_3(%arg0: i32) -> (i32, i32, i32) {
    %c0_i32 = arith.constant 0 : i32
    %c0_i32_0 = arith.constant 0 : i32
    %c0_i32_1 = arith.constant 0 : i32
    return %arg0, %c0_i32, %c0_i32_0 : i32, i32, i32
  }
}

</mosaic_0001>

<llo_original>
// kernel: tpu_custom_call.1
$region0: #{tpu_custom_call.1}
  #allocation0 [shape = 'u32[]', space=smem, size = 0x4, offset = 0x4, fixed_abs, tag = 'smem constant byte address 0x4 - core index']
  #allocation1 [shape = 'u32[72,128]{1,0:T(1,128)}', space=vmem, size = 0x9000, scoped, tag = 'internal scratch']
  %s0 = inlined_call_operand.hbm [shape: f32[4,4,256], index: 0, kind: input, shape index: {}]
  %s1 = inlined_call_operand.hbm [shape: f32[8,37], index: 1, kind: input, shape index: {}]
  %s2 = inlined_call_operand.hbm [shape: f32[3,256], index: 2, kind: input, shape index: {}]
  %s3 = inlined_call_operand.vmem [shape: f32[4,12,256], index: 3, kind: output, shape index: {}]
  %s4 = sld [smem:[#allocation0]]
  $region57: #{tpu_custom_call.1} parent=0
    _
  %s6 = ssub.s32 1, %s4
  %s7 = scalar_select 0, %s6, %s4
  $region1: #{tpu_custom_call.1} parent=0
    #allocation2 [shape = 'u8[16384]{0}', space=vmem, size = 0x4000, scoped, tag = 'input window, operand 0']
    #allocation3 [shape = 's32[2]{0}', space=sflag, size = 0x8, scoped, tag = 'scoped memory for tpu_custom_call.1']
    #allocation4 [shape = 'u8[4096]{0}', space=vmem, size = 0x1000, scoped, tag = 'input window, operand 1, single buffered']
    #allocation5 [shape = 's32[1]{0}', space=sflag, size = 0x4, scoped, tag = 'scoped memory for tpu_custom_call.1']
    #allocation6 [shape = 'u8[4096]{0}', space=vmem, size = 0x1000, scoped, tag = 'input window, operand 2, single buffered']
    %8 = vsyncpa [#allocation3], 0
    %s9 = scalar_lea.sflag [#allocation3], 1
    %10 = vsyncpa %s9, 0
    %11 = vsyncpa [#allocation5], 0
    loop: start=0, step=1, limit=4
    $region2: #{tpu_custom_call.1} parent=1 // loop_pre_header
      _
    $region3: #{tpu_custom_call.1} parent=1 // loop_header
      %s13 = sphi 0, %s17
      %p14 = scmp.ge.s32.totalorder %s13, 4
      %s23 = sphi 0, %s25
      %s26 = sphi 0, %s23
      %s27 = sphi 0, %s26
      %s43 = sphi 0, %s27
      %s47 = sphi 0, %s47
      %s49 = sphi 0, %s47
      %s50 = sphi 0, %s49
      %s64 = sphi 0, %s50
      %s68 = sphi 0, %s68
      %s70 = sphi 0, %s68
      %s71 = sphi 0, %s70
      %s85 = sphi 0, %s71
      %s91 = sphi 0, %s93
      %s94 = sphi 0, %s91
      %s95 = sphi 0, %s94
      %s111 = sphi 0, %s95
    $region4: #{tpu_custom_call.1} parent=1 // loop_header_branch
      %16 = sbr.rel (%p14) target = $region8
    $region5: #{tpu_custom_call.1} parent=1 // loop_body
      %s18 = ssub.s32 %s13, 1
      %s19 = ssub.s32 %s13, 2
      %s20 = sadd.s32 %s13, 1
      %s21 = ssub.s32 %s13, %s20
      %p22 = scmp.eq.s32.totalorder %s21, 0
      %s24 = sadd.s32 %s23, 1
      %s25 = scalar_select %p22, %s23, %s24
      %p28 = pneg %p22
      %p29 = scmp.eq.s32.totalorder %s13, 1
      %p30 = por %p28, %p29
      %p31 = scmp.ne.s32.totalorder %s23, %s26
      %p32 = scmp.eq.s32.totalorder %s13, 0
      %p33 = por %p31, %p32
      %p34 = scmp.ne.s32.totalorder %s23, %s26
      %p35 = scmp.eq.s32.totalorder %s18, 1
      %p36 = por %p34, %p35
      %p37 = scmp.ne.s32.totalorder %s26, %s27
      %p38 = scmp.eq.s32.totalorder %s18, 0
      %p39 = por %p37, %p38
      %p40 = scmp.ne.s32.totalorder %s26, %s27
      %p41 = scmp.eq.s32.totalorder %s19, 1
      %p42 = por %p40, %p41
      %p44 = scmp.ne.s32.totalorder %s27, %s43
      %p45 = scmp.eq.s32.totalorder %s19, 0
      %p46 = por %p44, %p45
      %s48 = sadd.s32 %s47, 1
      %p51 = scmp.eq.s32.totalorder %s13, 1
      %p52 = scmp.ne.s32.totalorder %s47, %s49
      %p53 = scmp.eq.s32.totalorder %s13, 0
      %p54 = por %p52, %p53
      %p55 = scmp.ne.s32.totalorder %s47, %s49
      %p56 = scmp.eq.s32.totalorder %s18, 1
      %p57 = por %p55, %p56
      %p58 = scmp.ne.s32.totalorder %s49, %s50
      %p59 = scmp.eq.s32.totalorder %s18, 0
      %p60 = por %p58, %p59
      %p61 = scmp.ne.s32.totalorder %s49, %s50
      %p62 = scmp.eq.s32.totalorder %s19, 1
      %p63 = por %p61, %p62
      %p65 = scmp.ne.s32.totalorder %s50, %s64
      %p66 = scmp.eq.s32.totalorder %s19, 0
      %p67 = por %p65, %p66
      %s69 = sadd.s32 %s68, 1
      %p72 = scmp.eq.s32.totalorder %s13, 1
      %p73 = scmp.ne.s32.totalorder %s68, %s70
      %p74 = scmp.eq.s32.totalorder %s13, 0
      %p75 = por %p73, %p74
      %p76 = scmp.ne.s32.totalorder %s68, %s70
      %p77 = scmp.eq.s32.totalorder %s18, 1
      %p78 = por %p76, %p77
      %p79 = scmp.ne.s32.totalorder %s70, %s71
      %p80 = scmp.eq.s32.totalorder %s18, 0
      %p81 = por %p79, %p80
      %p82 = scmp.ne.s32.totalorder %s70, %s71
      %p83 = scmp.eq.s32.totalorder %s19, 1
      %p84 = por %p82, %p83
      %p86 = scmp.ne.s32.totalorder %s71, %s85
      %p87 = scmp.eq.s32.totalorder %s19, 0
      %p88 = por %p86, %p87
      %s89 = ssub.s32 %s13, %s20
      %p90 = scmp.eq.s32.totalorder %s89, 0
      %s92 = sadd.s32 %s91, 1
      %s93 = scalar_select %p90, %s91, %s92
      %p96 = pneg %p90
      %p97 = scmp.eq.s32.totalorder %s13, 1
      %p98 = por %p96, %p97
      %p99 = scmp.ne.s32.totalorder %s91, %s94
      %p100 = scmp.eq.s32.totalorder %s13, 0
      %p101 = por %p99, %p100
      %p102 = scmp.ne.s32.totalorder %s91, %s94
      %p103 = scmp.eq.s32.totalorder %s18, 1
      %p104 = por %p102, %p103
      %p105 = scmp.ne.s32.totalorder %s94, %s95
      %p106 = scmp.eq.s32.totalorder %s18, 0
      %p107 = por %p105, %p106
      %p108 = scmp.ne.s32.totalorder %s94, %s95
      %p109 = scmp.eq.s32.totalorder %s19, 1
      %p110 = por %p108, %p109
      %p112 = scmp.ne.s32.totalorder %s95, %s111
      %p113 = scmp.eq.s32.totalorder %s19, 0
      %p114 = por %p112, %p113
      %p115 = scmp.le.s32.totalorder 1, %s13
      %p116 = scmp.lt.s32.totalorder %s13, 3
      %p117 = pnand %p115, %p116
      %p118 = pneg %p117
      // Predicated region
      $region9: #{tpu_custom_call.1} parent=5 // pred_check
        _
      $region10: #{tpu_custom_call.1} parent=5 // pred_check_branch
        %120 = sbr.rel (%p117) target = $region12
      $region11: #{tpu_custom_call.1} parent=5 // pred_region
        %s121 = ssub.s32 %s13, 1
        // Predicated region
        $region13: #{tpu_custom_call.1} parent=11 // pred_check
          %p122 = pneg %p60
        $region14: #{tpu_custom_call.1} parent=11 // pred_check_branch
          %124 = sbr.rel (%p122) target = $region16
        $region15: #{tpu_custom_call.1} parent=11 // pred_region
          %126 = vsyncadd [#allocation5], 0
          %s128 = sshll.u32 %s1, 4
          %s129 = int_to_ptr.hbm [resolvable:$true] %s128
          %s130 = sshll.u32 [#allocation4], 4
          %s131 = int_to_ptr.vmem [resolvable:$true] %s130
          %133 = dma.hbm_to_vmem [thread:$0]  %s129, 128, %s131, [#allocation5]
        $region16: #{tpu_custom_call.1} parent=11 // pred_fallthru
          _
        // Predicated region
        $region17: #{tpu_custom_call.1} parent=11 // pred_check
          %p134 = pneg %p81
        $region18: #{tpu_custom_call.1} parent=11 // pred_check_branch
          %136 = sbr.rel (%p134) target = $region20
        $region19: #{tpu_custom_call.1} parent=11 // pred_region
          %138 = vsyncadd [#allocation5], 0
          %s140 = sshll.u32 %s2, 4
          %s141 = int_to_ptr.hbm [resolvable:$true] %s140
          %s142 = sshll.u32 [#allocation6], 4
          %s143 = int_to_ptr.vmem [resolvable:$true] %s142
          %145 = dma.hbm_to_vmem [thread:$0]  %s141, 128, %s143, [#allocation5]
        $region20: #{tpu_custom_call.1} parent=11 // pred_fallthru
          _
      $region12: #{tpu_custom_call.1} parent=5 // pred_fallthru
        _
      %p146 = scmp.lt.s32.totalorder %s13, 2
      // Predicated region
      $region21: #{tpu_custom_call.1} parent=5 // pred_check
        %p147 = pneg %p146
      $region22: #{tpu_custom_call.1} parent=5 // pred_check_branch
        %149 = sbr.rel (%p147) target = $region24
      $region23: #{tpu_custom_call.1} parent=5 // pred_region
        // Predicated region
        $region25: #{tpu_custom_call.1} parent=23 // pred_check
          %p150 = pneg %p33
        $region26: #{tpu_custom_call.1} parent=23 // pred_check_branch
          %152 = sbr.rel (%p150) target = $region28
        $region27: #{tpu_custom_call.1} parent=23 // pred_region
          %s153 = sand.u32 %s23, 1
          %s154 = scalar_lea.sflag [#allocation3], %s153
          %s155 = sand.u32 %s23, 1
          %s156 = smul.addr %s155, 16
          %s157 = scalar_lea.vmem [#allocation2], %s156
          %s158 = smul.u32 2, %s13
          %160 = vsyncadd %s154, 0
          %s161 = smul.addr %s158, 2
          %s162 = smul.addr %s161, 4
          %s163 = scalar_lea.hbm %s0, %s162
          %s164 = sshll.u32 %s163, 4
          %s165 = int_to_ptr.hbm [resolvable:$true] %s164
          %s166 = sshll.u32 %s157, 4
          %s167 = int_to_ptr.vmem [resolvable:$true] %s166
          %172 = dma.hbm_to_vmem [thread:$0]  %s165, 256, %s167, %s154, 128, 128, 8
        $region28: #{tpu_custom_call.1} parent=23 // pred_fallthru
          _
      $region24: #{tpu_custom_call.1} parent=5 // pred_fallthru
        _
      %p173 = scmp.le.s32.totalorder 1, %s13
      %p174 = scmp.lt.s32.totalorder %s13, 3
      %p175 = pnand %p173, %p174
      %p176 = pneg %p175
      // Predicated region
      $region29: #{tpu_custom_call.1} parent=5 // pred_check
        _
      $region30: #{tpu_custom_call.1} parent=5 // pred_check_branch
        %178 = sbr.rel (%p175) target = $region32
      $region31: #{tpu_custom_call.1} parent=5 // pred_region
        %s179 = ssub.s32 %s13, 1
        %s180 = sand.u32 %s26, 1
        %s181 = scalar_lea.sflag [#allocation3], %s180
        %s182 = sand.u32 %s26, 1
        %s183 = smul.addr %s182, 16
        %s184 = scalar_lea.vmem [#allocation2], %s183
        // Predicated region
        $region33: #{tpu_custom_call.1} parent=31 // pred_check
          %p185 = pneg %p39
        $region34: #{tpu_custom_call.1} parent=31 // pred_check_branch
          %187 = sbr.rel (%p185) target = $region36
        $region35: #{tpu_custom_call.1} parent=31 // pred_region
          %189 = dma.done %s181, 256
        $region36: #{tpu_custom_call.1} parent=31 // pred_fallthru
          _
        // Predicated region
        $region37: #{tpu_custom_call.1} parent=31 // pred_check
          %p190 = pneg %p60
        $region38: #{tpu_custom_call.1} parent=31 // pred_check_branch
          %192 = sbr.rel (%p190) target = $region40
        $region39: #{tpu_custom_call.1} parent=31 // pred_region
          %194 = dma.done [#allocation5], 128
        $region40: #{tpu_custom_call.1} parent=31 // pred_fallthru
          _
        // Predicated region
        $region41: #{tpu_custom_call.1} parent=31 // pred_check
          %p195 = pneg %p81
        $region42: #{tpu_custom_call.1} parent=31 // pred_check_branch
          %197 = sbr.rel (%p195) target = $region44
        $region43: #{tpu_custom_call.1} parent=31 // pred_region
          %199 = dma.done [#allocation5], 128
        $region44: #{tpu_custom_call.1} parent=31 // pred_fallthru
          _
        %s200 = sand.u32 %s26, 1
        %s201 = scalar_lea.sflag [#allocation3], %s200
        %s202 = sand.u32 %s26, 1
        %s203 = smul.addr %s202, 16
        %s204 = scalar_lea.vmem [#allocation2], %s203
        %p205 = pneg %p39
        %p206 = pneg %p36
        %p207 = pneg %p60
        %p208 = pneg %p57
        %p209 = pneg %p81
        %p210 = pneg %p78
        %p211 = pneg %p107
        %p212 = pneg %p104
        %s213 = smul.u32 2, %s18
        %p214 = scmp.lt.s32.totalorder %s213, 3
        %s215 = scalar_select %p214, %s213, 3
        %s216 = smul.addr %s215, 4
        %s217 = smul.addr %s216, 8
        %s218 = scalar_lea.vmem %s3, %s217
        %s219 = smul.u32 2, %s18
        %s220 = smul.u32 2, %s18
        %p221 = scmp.lt.s32.totalorder %s220, 3
        %s222 = scalar_select %p221, %s220, 3
        %s223 = smul.addr %s222, 4
        %s224 = smul.addr %s223, 8
        %s225 = scalar_lea.vmem %s3, %s224
        %s226 = smul.u32 2, %s18
        %v227 = vld [vmem:[#allocation4] sm:$0xff]
        %v228 = vld [vmem:[#allocation6] sm:$0x77]
        %v229 = vld [vmem:[%s184] sm:$0xff]
        %231 = vst [vmem:[#allocation1] ss:$2 sm:$0xff] %v229
        %v232 = vld.sshfl [vmem:[#allocation1] sm:$0xff pattern:$0x75316420]
        %v233 = vld.sshfl [vmem:[#allocation1 + $0x8] sm:$0xff pattern:$0x75316420]
        %234 = vrot.lane.b32.xlu0 %v232, 17
        %v235 = vpop.permute.xlu0 %234
        %236 = vrot.lane.b32.xlu0 %v233, 17
        %v237 = vpop.permute.xlu0 %236
        %vm238 = vcmask 138240
        %v239 = vsel %vm238, %v235, %v237
        %v242 = vsel %vm238, 0.0, %v235
        %v244 = vperm.slane %v228, 0
        %v245 = vperm.slane %v228, 4
        %v248 = vperm.slane %v244, 0
        %v249 = vperm.slane %v245, 0
        %v250 = vmul.f32 %v242, %v248
        %v251 = vmul.f32 %v239, %v249
        %252 = vst [vmem:[#allocation1] ss:$2 sm:$0xff] %v229
        %v253 = vld.sshfl [vmem:[#allocation1] sm:$0xff pattern:$0x75316420]
        %v254 = vld.sshfl [vmem:[#allocation1 + $0x8] sm:$0xff pattern:$0x75316420]
        %255 = vrot.lane.b32.xlu0 %v253, 16
        %v256 = vpop.permute.xlu0 %255
        %257 = vrot.lane.b32.xlu0 %v254, 16
        %v258 = vpop.permute.xlu0 %257
        %vm259 = vcmask 130048
        %v260 = vsel %vm259, %v256, %v258
        %v262 = vsel %vm259, 0.0, %v256
        %263 = vst [vmem:[#allocation1] ss:$2 sm:$0xff] %v229
        %v264 = vld.sshfl [vmem:[#allocation1] sm:$0xff pattern:$0x75316420]
        %v265 = vld.sshfl [vmem:[#allocation1 + $0x8] sm:$0xff pattern:$0x75316420]
        %266 = vrot.lane.b32.xlu0 %v264, 15
        %v267 = vpop.permute.xlu0 %266
        %268 = vrot.lane.b32.xlu0 %v265, 15
        %v269 = vpop.permute.xlu0 %268
        %vm270 = vcmask 121856
        %v271 = vsel %vm270, %v267, %v269
        %v274 = vsel %vm270, 0.0, %v267
        %v275 = vperm.slane %v228, 2
        %v276 = vperm.slane %v228, 6
        %v279 = vperm.slane %v275, 2
        %v280 = vperm.slane %v276, 2
        %v281 = vmul.f32 %v274, %v279
        %v282 = vmul.f32 %v271, %v280
        %283 = vst [vmem:[#allocation1] ss:$2 sm:$0xff] %v229
        %v284 = vld.sshfl [vmem:[#allocation1] sm:$0xff pattern:$0x75316420]
        %v285 = vld.sshfl [vmem:[#allocation1 + $0x8] sm:$0xff pattern:$0x75316420]
        %286 = vrot.lane.b32.xlu0 %v284, 1
        %v287 = vpop.permute.xlu0 %286
        %288 = vrot.lane.b32.xlu0 %v285, 1
        %v289 = vpop.permute.xlu0 %288
        %vm290 = vcmask 7168
        %v291 = vsel %vm290, %v287, %v289
        %v294 = vsel %vm290, 0.0, %v287
        %v295 = vmul.f32 %v294, %v248
        %v296 = vmul.f32 %v291, %v249
        %297 = vst [vmem:[#allocation1] ss:$2 sm:$0xff] %v229
        %v298 = vld.sshfl [vmem:[#allocation1] sm:$0xff pattern:$0x75316420]
        %v299 = vld.sshfl [vmem:[#allocation1 + $0x8] sm:$0xff pattern:$0x75316420]
        %300 = vrot.lane.b32.xlu0 %v298, 127
        %v301 = vpop.permute.xlu0 %300
        %302 = vrot.lane.b32.xlu0 %v299, 127
        %v303 = vpop.permute.xlu0 %302
        %vm304 = vcmask 1039360
        %v305 = vsel %vm304, %v301, %v303
        %v308 = vsel %vm304, %v303, 0.0
        %v309 = vmul.f32 %v305, %v279
        %v310 = vmul.f32 %v308, %v280
        %311 = vst [vmem:[#allocation1] ss:$2 sm:$0xff] %v229
        %v312 = vld.sshfl [vmem:[#allocation1] sm:$0xff pattern:$0x75316420]
        %v313 = vld.sshfl [vmem:[#allocation1 + $0x8] sm:$0xff pattern:$0x75316420]
        %314 = vrot.lane.b32.xlu0 %v312, 113
        %v315 = vpop.permute.xlu0 %314
        %316 = vrot.lane.b32.xlu0 %v313, 113
        %v317 = vpop.permute.xlu0 %316
        %vm318 = vcmask 924672
        %v319 = vsel %vm318, %v315, %v317
        %v322 = vsel %vm318, %v317, 0.0
        %v323 = vmul.f32 %v319, %v248
        %v324 = vmul.f32 %v322, %v249
        %325 = vst [vmem:[#allocation1] ss:$2 sm:$0xff] %v229
        %v326 = vld.sshfl [vmem:[#allocation1] sm:$0xff pattern:$0x75316420]
        %v327 = vld.sshfl [vmem:[#allocation1 + $0x8] sm:$0xff pattern:$0x75316420]
        %328 = vrot.lane.b32.xlu0 %v326, 112
        %v329 = vpop.permute.xlu0 %328
        %330 = vrot.lane.b32.xlu0 %v327, 112
        %v331 = vpop.permute.xlu0 %330
        %vm332 = vcmask 916480
        %v333 = vsel %vm332, %v329, %v331
        %v335 = vsel %vm332, %v331, 0.0
        %336 = vst [vmem:[#allocation1] ss:$2 sm:$0xff] %v229
        %v337 = vld.sshfl [vmem:[#allocation1] sm:$0xff pattern:$0x75316420]
        %v338 = vld.sshfl [vmem:[#allocation1 + $0x8] sm:$0xff pattern:$0x75316420]
        %339 = vrot.lane.b32.xlu0 %v337, 111
        %v340 = vpop.permute.xlu0 %339
        %341 = vrot.lane.b32.xlu0 %v338, 111
        %v342 = vpop.permute.xlu0 %341
        %vm343 = vcmask 908288
        %v344 = vsel %vm343, %v340, %v342
        %v347 = vsel %vm343, %v342, 0.0
        %v348 = vmul.f32 %v344, %v279
        %v349 = vmul.f32 %v347, %v280
        %v351 = vrot.slane %v262, 4
        %v352 = vrot.slane %v260, 4
        %v357 = vrot.slane %v295, 4
        %v358 = vrot.slane %v296, 4
        %361 = vst [vmem:[#allocation1] ss:$2 sm:$0xff] %v229
        %v362 = vld.sshfl [vmem:[#allocation1] sm:$0xff pattern:$0x75316420]
        %v363 = vld.sshfl [vmem:[#allocation1 + $0x8] sm:$0xff pattern:$0x75316420]
        %v368 = vrot.slane %v309, 4
        %v369 = vrot.slane %v310, 4
        %v373 = vrot.slane %v333, 4
        %v374 = vrot.slane %v335, 4
        %vm377 = vcmask 1043456
        %v378 = vsel %vm377, %v250, %v351
        %v379 = vsel %vm377, %v251, %v352
        %v380 = vsel %vm377, %v281, %v357
        %v381 = vsel %vm377, %v282, %v358
        %v382 = vsel %vm377, %v362, %v368
        %v383 = vsel %vm377, %v363, %v369
        %v384 = vsel %vm377, %v323, %v373
        %v385 = vsel %vm377, %v324, %v374
        %v386 = vsel %vm377, %v348, 1.0
        %v387 = vsel %vm377, %v349, 1.0
        %vm388 = vcmask 302080
        %v390 = vsel %vm388, %v227, 0
        %vm392 = vcmask 1044480
        %v394 = vsel %vm392, %v386, 0
        %v397 = vsel %vm392, %v387, 0
        %399 = vmatpush.msra.mxu0 0.0
        %400 = vmatpush.msra.mxu0 0.0
        %401 = vmatpush.msra.mxu0 0.0
        %402 = vmatpush.msra.mxu0 0.0
        %403 = vmatpush.msra.mxu0 0.0
        %404 = vmatpush.msra.mxu0 0.0
        %405 = vmatpush.msra.mxu0 0.0
        %406 = vmatpush.msra.mxu0 0.0
        %407 = vmatpush.msra.mxu0 0.0
        %408 = vmatpush.msra.mxu0 0.0
        %409 = vmatpush.msra.mxu0 0.0
        %v410 = vand.u32 %v394, 4294901760
        %411 = vmatpush.msra.mxu0 %v410
        %v412 = vand.u32 %v384, 4294901760
        %413 = vmatpush.msra.mxu0 %v412
        %v414 = vand.u32 %v382, 4294901760
        %415 = vmatpush.msra.mxu0 %v414
        %v416 = vand.u32 %v380, 4294901760
        %417 = vmatpush.msra.mxu0 %v416
        %v418 = vand.u32 %v378, 4294901760
        %419 = vmatpush.msra.mxu0 %v418
        %v420 = vand.u32 %v390, 4294901760
        %v421 = vsub.f32 %v390, %v420
        %v422 = vand.u32 %v421, 4294901760
        %v423 = vsub.f32 %v421, %v422
        %v424 = vand.u32 %v423, 4294901760
        %425 = vmatmul.f32.gmra.mxu0 %v424
        %v426 = vpop.f32.mrf.mxu0
        %v427 = vadd.f32 0.0, %v426
        %428 = vdwg.mxu0
        %429 = vmatpush.msra.mxu0 0.0
        %430 = vmatpush.msra.mxu0 0.0
        %431 = vmatpush.msra.mxu0 0.0
        %432 = vmatpush.msra.mxu0 0.0
        %433 = vmatpush.msra.mxu0 0.0
        %434 = vmatpush.msra.mxu0 0.0
        %435 = vmatpush.msra.mxu0 0.0
        %436 = vmatpush.msra.mxu0 0.0
        %437 = vmatpush.msra.mxu0 0.0
        %438 = vmatpush.msra.mxu0 0.0
        %439 = vmatpush.msra.mxu0 0.0
        %v440 = vand.u32 %v394, 4294901760
        %v441 = vsub.f32 %v394, %v440
        %v442 = vand.u32 %v441, 4294901760
        %v443 = vsub.f32 %v441, %v442
        %v444 = vand.u32 %v443, 4294901760
        %445 = vmatpush.msra.mxu0 %v444
        %v446 = vand.u32 %v384, 4294901760
        %v447 = vsub.f32 %v384, %v446
        %v448 = vand.u32 %v447, 4294901760
        %v449 = vsub.f32 %v447, %v448
        %v450 = vand.u32 %v449, 4294901760
        %451 = vmatpush.msra.mxu0 %v450
        %v452 = vand.u32 %v382, 4294901760
        %v453 = vsub.f32 %v382, %v452
        %v454 = vand.u32 %v453, 4294901760
        %v455 = vsub.f32 %v453, %v454
        %v456 = vand.u32 %v455, 4294901760
        %457 = vmatpush.msra.mxu0 %v456
        %v458 = vand.u32 %v380, 4294901760
        %v459 = vsub.f32 %v380, %v458
        %v460 = vand.u32 %v459, 4294901760
        %v461 = vsub.f32 %v459, %v460
        %v462 = vand.u32 %v461, 4294901760
        %463 = vmatpush.msra.mxu0 %v462
        %v464 = vand.u32 %v378, 4294901760
        %v465 = vsub.f32 %v378, %v464
        %v466 = vand.u32 %v465, 4294901760
        %v467 = vsub.f32 %v465, %v466
        %v468 = vand.u32 %v467, 4294901760
        %469 = vmatpush.msra.mxu0 %v468
        %v470 = vand.u32 %v390, 4294901760
        %471 = vmatmul.f32.gmra.mxu0 %v470
        %v472 = vpop.f32.mrf.mxu0
        %v473 = vadd.f32 %v427, %v472
        %474 = vdwg.mxu0
        %475 = vmatpush.msra.mxu0 0.0
        %476 = vmatpush.msra.mxu0 0.0
        %477 = vmatpush.msra.mxu0 0.0
        %478 = vmatpush.msra.mxu0 0.0
        %479 = vmatpush.msra.mxu0 0.0
        %480 = vmatpush.msra.mxu0 0.0
        %481 = vmatpush.msra.mxu0 0.0
        %482 = vmatpush.msra.mxu0 0.0
        %483 = vmatpush.msra.mxu0 0.0
        %484 = vmatpush.msra.mxu0 0.0
        %485 = vmatpush.msra.mxu0 0.0
        %v486 = vand.u32 %v394, 4294901760
        %v487 = vsub.f32 %v394, %v486
        %488 = vmatpush.msra.mxu0 %v487
        %v489 = vand.u32 %v384, 4294901760
        %v490 = vsub.f32 %v384, %v489
        %491 = vmatpush.msra.mxu0 %v490
        %v492 = vand.u32 %v382, 4294901760
        %v493 = vsub.f32 %v382, %v492
        %494 = vmatpush.msra.mxu0 %v493
        %v495 = vand.u32 %v380, 4294901760
        %v496 = vsub.f32 %v380, %v495
        %497 = vmatpush.msra.mxu0 %v496
        %v498 = vand.u32 %v378, 4294901760
        %v499 = vsub.f32 %v378, %v498
        %500 = vmatpush.msra.mxu0 %v499
        %v501 = vand.u32 %v390, 4294901760
        %v502 = vsub.f32 %v390, %v501
        %503 = vmatmul.f32.gmra.mxu0 %v502
        %v504 = vpop.f32.mrf.mxu0
        %v505 = vadd.f32 %v473, %v504
        %506 = vdwg.mxu0
        %507 = vmatpush.msra.mxu0 0.0
        %508 = vmatpush.msra.mxu0 0.0
        %509 = vmatpush.msra.mxu0 0.0
        %510 = vmatpush.msra.mxu0 0.0
        %511 = vmatpush.msra.mxu0 0.0
        %512 = vmatpush.msra.mxu0 0.0
        %513 = vmatpush.msra.mxu0 0.0
        %514 = vmatpush.msra.mxu0 0.0
        %515 = vmatpush.msra.mxu0 0.0
        %516 = vmatpush.msra.mxu0 0.0
        %517 = vmatpush.msra.mxu0 0.0
        %v518 = vand.u32 %v394, 4294901760
        %519 = vmatpush.msra.mxu0 %v518
        %v520 = vand.u32 %v384, 4294901760
        %521 = vmatpush.msra.mxu0 %v520
        %v522 = vand.u32 %v382, 4294901760
        %523 = vmatpush.msra.mxu0 %v522
        %v524 = vand.u32 %v380, 4294901760
        %525 = vmatpush.msra.mxu0 %v524
        %v526 = vand.u32 %v378, 4294901760
        %527 = vmatpush.msra.mxu0 %v526
        %v528 = vand.u32 %v390, 4294901760
        %v529 = vsub.f32 %v390, %v528
        %v530 = vand.u32 %v529, 4294901760
        %531 = vmatmul.f32.gmra.mxu0 %v530
        %v532 = vpop.f32.mrf.mxu0
        %v533 = vadd.f32 %v505, %v532
        %534 = vdwg.mxu0
        %535 = vmatpush.msra.mxu0 0.0
        %536 = vmatpush.msra.mxu0 0.0
        %537 = vmatpush.msra.mxu0 0.0
        %538 = vmatpush.msra.mxu0 0.0
        %539 = vmatpush.msra.mxu0 0.0
        %540 = vmatpush.msra.mxu0 0.0
        %541 = vmatpush.msra.mxu0 0.0
        %542 = vmatpush.msra.mxu0 0.0
        %543 = vmatpush.msra.mxu0 0.0
        %544 = vmatpush.msra.mxu0 0.0
        %545 = vmatpush.msra.mxu0 0.0
        %v546 = vand.u32 %v394, 4294901760
        %v547 = vsub.f32 %v394, %v546
        %v548 = vand.u32 %v547, 4294901760
        %549 = vmatpush.msra.mxu0 %v548
        %v550 = vand.u32 %v384, 4294901760
        %v551 = vsub.f32 %v384, %v550
        %v552 = vand.u32 %v551, 4294901760
        %553 = vmatpush.msra.mxu0 %v552
        %v554 = vand.u32 %v382, 4294901760
        %v555 = vsub.f32 %v382, %v554
        %v556 = vand.u32 %v555, 4294901760
        %557 = vmatpush.msra.mxu0 %v556
        %v558 = vand.u32 %v380, 4294901760
        %v559 = vsub.f32 %v380, %v558
        %v560 = vand.u32 %v559, 4294901760
        %561 = vmatpush.msra.mxu0 %v560
        %v562 = vand.u32 %v378, 4294901760
        %v563 = vsub.f32 %v378, %v562
        %v564 = vand.u32 %v563, 4294901760
        %565 = vmatpush.msra.mxu0 %v564
        %v566 = vand.u32 %v390, 4294901760
        %567 = vmatmul.f32.gmra.mxu0 %v566
        %v568 = vpop.f32.mrf.mxu0
        %v569 = vadd.f32 %v533, %v568
        %570 = vdwg.mxu0
        %571 = vmatpush.msra.mxu0 0.0
        %572 = vmatpush.msra.mxu0 0.0
        %573 = vmatpush.msra.mxu0 0.0
        %574 = vmatpush.msra.mxu0 0.0
        %575 = vmatpush.msra.mxu0 0.0
        %576 = vmatpush.msra.mxu0 0.0
        %577 = vmatpush.msra.mxu0 0.0
        %578 = vmatpush.msra.mxu0 0.0
        %579 = vmatpush.msra.mxu0 0.0
        %580 = vmatpush.msra.mxu0 0.0
        %581 = vmatpush.msra.mxu0 0.0
        %v582 = vand.u32 %v394, 4294901760
        %583 = vmatpush.msra.mxu0 %v582
        %v584 = vand.u32 %v384, 4294901760
        %585 = vmatpush.msra.mxu0 %v584
        %v586 = vand.u32 %v382, 4294901760
        %587 = vmatpush.msra.mxu0 %v586
        %v588 = vand.u32 %v380, 4294901760
        %589 = vmatpush.msra.mxu0 %v588
        %v590 = vand.u32 %v378, 4294901760
        %591 = vmatpush.msra.mxu0 %v590
        %v592 = vand.u32 %v390, 4294901760
        %593 = vmatmul.f32.gmra.mxu0 %v592
        %v594 = vpop.f32.mrf.mxu0
        %v595 = vadd.f32 %v569, %v594
        %596 = vdwg.mxu0
        %597 = vmatpush.msra.mxu0 0.0
        %598 = vmatpush.msra.mxu0 0.0
        %599 = vmatpush.msra.mxu0 0.0
        %600 = vmatpush.msra.mxu0 0.0
        %601 = vmatpush.msra.mxu0 0.0
        %602 = vmatpush.msra.mxu0 0.0
        %603 = vmatpush.msra.mxu0 0.0
        %604 = vmatpush.msra.mxu0 0.0
        %605 = vmatpush.msra.mxu0 0.0
        %606 = vmatpush.msra.mxu0 0.0
        %607 = vmatpush.msra.mxu0 0.0
        %v608 = vand.u32 %v397, 4294901760
        %609 = vmatpush.msra.mxu0 %v608
        %v610 = vand.u32 %v385, 4294901760
        %611 = vmatpush.msra.mxu0 %v610
        %v612 = vand.u32 %v383, 4294901760
        %613 = vmatpush.msra.mxu0 %v612
        %v614 = vand.u32 %v381, 4294901760
        %615 = vmatpush.msra.mxu0 %v614
        %v616 = vand.u32 %v379, 4294901760
        %617 = vmatpush.msra.mxu0 %v616
        %v618 = vand.u32 %v390, 4294901760
        %v619 = vsub.f32 %v390, %v618
        %v620 = vand.u32 %v619, 4294901760
        %v621 = vsub.f32 %v619, %v620
        %v622 = vand.u32 %v621, 4294901760
        %623 = vmatmul.f32.gmra.mxu0 %v622
        %v624 = vpop.f32.mrf.mxu0
        %v625 = vadd.f32 0.0, %v624
        %626 = vdwg.mxu0
        %627 = vmatpush.msra.mxu0 0.0
        %628 = vmatpush.msra.mxu0 0.0
        %629 = vmatpush.msra.mxu0 0.0
        %630 = vmatpush.msra.mxu0 0.0
        %631 = vmatpush.msra.mxu0 0.0
        %632 = vmatpush.msra.mxu0 0.0
        %633 = vmatpush.msra.mxu0 0.0
        %634 = vmatpush.msra.mxu0 0.0
        %635 = vmatpush.msra.mxu0 0.0
        %636 = vmatpush.msra.mxu0 0.0
        %637 = vmatpush.msra.mxu0 0.0
        %v638 = vand.u32 %v397, 4294901760
        %v639 = vsub.f32 %v397, %v638
        %v640 = vand.u32 %v639, 4294901760
        %v641 = vsub.f32 %v639, %v640
        %v642 = vand.u32 %v641, 4294901760
        %643 = vmatpush.msra.mxu0 %v642
        %v644 = vand.u32 %v385, 4294901760
        %v645 = vsub.f32 %v385, %v644
        %v646 = vand.u32 %v645, 4294901760
        %v647 = vsub.f32 %v645, %v646
        %v648 = vand.u32 %v647, 4294901760
        %649 = vmatpush.msra.mxu0 %v648
        %v650 = vand.u32 %v383, 4294901760
        %v651 = vsub.f32 %v383, %v650
        %v652 = vand.u32 %v651, 4294901760
        %v653 = vsub.f32 %v651, %v652
        %v654 = vand.u32 %v653, 4294901760
        %655 = vmatpush.msra.mxu0 %v654
        %v656 = vand.u32 %v381, 4294901760
        %v657 = vsub.f32 %v381, %v656
        %v658 = vand.u32 %v657, 4294901760
        %v659 = vsub.f32 %v657, %v658
        %v660 = vand.u32 %v659, 4294901760
        %661 = vmatpush.msra.mxu0 %v660
        %v662 = vand.u32 %v379, 4294901760
        %v663 = vsub.f32 %v379, %v662
        %v664 = vand.u32 %v663, 4294901760
        %v665 = vsub.f32 %v663, %v664
        %v666 = vand.u32 %v665, 4294901760
        %667 = vmatpush.msra.mxu0 %v666
        %v668 = vand.u32 %v390, 4294901760
        %669 = vmatmul.f32.gmra.mxu0 %v668
        %v670 = vpop.f32.mrf.mxu0
        %v671 = vadd.f32 %v625, %v670
        %672 = vdwg.mxu0
        %673 = vmatpush.msra.mxu0 0.0
        %674 = vmatpush.msra.mxu0 0.0
        %675 = vmatpush.msra.mxu0 0.0
        %676 = vmatpush.msra.mxu0 0.0
        %677 = vmatpush.msra.mxu0 0.0
        %678 = vmatpush.msra.mxu0 0.0
        %679 = vmatpush.msra.mxu0 0.0
        %680 = vmatpush.msra.mxu0 0.0
        %681 = vmatpush.msra.mxu0 0.0
        %682 = vmatpush.msra.mxu0 0.0
        %683 = vmatpush.msra.mxu0 0.0
        %v684 = vand.u32 %v397, 4294901760
        %v685 = vsub.f32 %v397, %v684
        %686 = vmatpush.msra.mxu0 %v685
        %v687 = vand.u32 %v385, 4294901760
        %v688 = vsub.f32 %v385, %v687
        %689 = vmatpush.msra.mxu0 %v688
        %v690 = vand.u32 %v383, 4294901760
        %v691 = vsub.f32 %v383, %v690
        %692 = vmatpush.msra.mxu0 %v691
        %v693 = vand.u32 %v381, 4294901760
        %v694 = vsub.f32 %v381, %v693
        %695 = vmatpush.msra.mxu0 %v694
        %v696 = vand.u32 %v379, 4294901760
        %v697 = vsub.f32 %v379, %v696
        %698 = vmatpush.msra.mxu0 %v697
        %v699 = vand.u32 %v390, 4294901760
        %v700 = vsub.f32 %v390, %v699
        %701 = vmatmul.f32.gmra.mxu0 %v700
        %v702 = vpop.f32.mrf.mxu0
        %v703 = vadd.f32 %v671, %v702
        %704 = vdwg.mxu0
        %705 = vmatpush.msra.mxu0 0.0
        %706 = vmatpush.msra.mxu0 0.0
        %707 = vmatpush.msra.mxu0 0.0
        %708 = vmatpush.msra.mxu0 0.0
        %709 = vmatpush.msra.mxu0 0.0
        %710 = vmatpush.msra.mxu0 0.0
        %711 = vmatpush.msra.mxu0 0.0
        %712 = vmatpush.msra.mxu0 0.0
        %713 = vmatpush.msra.mxu0 0.0
        %714 = vmatpush.msra.mxu0 0.0
        %715 = vmatpush.msra.mxu0 0.0
        %v716 = vand.u32 %v397, 4294901760
        %717 = vmatpush.msra.mxu0 %v716
        %v718 = vand.u32 %v385, 4294901760
        %719 = vmatpush.msra.mxu0 %v718
        %v720 = vand.u32 %v383, 4294901760
        %721 = vmatpush.msra.mxu0 %v720
        %v722 = vand.u32 %v381, 4294901760
        %723 = vmatpush.msra.mxu0 %v722
        %v724 = vand.u32 %v379, 4294901760
        %725 = vmatpush.msra.mxu0 %v724
        %v726 = vand.u32 %v390, 4294901760
        %v727 = vsub.f32 %v390, %v726
        %v728 = vand.u32 %v727, 4294901760
        %729 = vmatmul.f32.gmra.mxu0 %v728
        %v730 = vpop.f32.mrf.mxu0
        %v731 = vadd.f32 %v703, %v730
        %732 = vdwg.mxu0
        %733 = vmatpush.msra.mxu0 0.0
        %734 = vmatpush.msra.mxu0 0.0
        %735 = vmatpush.msra.mxu0 0.0
        %736 = vmatpush.msra.mxu0 0.0
        %737 = vmatpush.msra.mxu0 0.0
        %738 = vmatpush.msra.mxu0 0.0
        %739 = vmatpush.msra.mxu0 0.0
        %740 = vmatpush.msra.mxu0 0.0
        %741 = vmatpush.msra.mxu0 0.0
        %742 = vmatpush.msra.mxu0 0.0
        %743 = vmatpush.msra.mxu0 0.0
        %v744 = vand.u32 %v397, 4294901760
        %v745 = vsub.f32 %v397, %v744
        %v746 = vand.u32 %v745, 4294901760
        %747 = vmatpush.msra.mxu0 %v746
        %v748 = vand.u32 %v385, 4294901760
        %v749 = vsub.f32 %v385, %v748
        %v750 = vand.u32 %v749, 4294901760
        %751 = vmatpush.msra.mxu0 %v750
        %v752 = vand.u32 %v383, 4294901760
        %v753 = vsub.f32 %v383, %v752
        %v754 = vand.u32 %v753, 4294901760
        %755 = vmatpush.msra.mxu0 %v754
        %v756 = vand.u32 %v381, 4294901760
        %v757 = vsub.f32 %v381, %v756
        %v758 = vand.u32 %v757, 4294901760
        %759 = vmatpush.msra.mxu0 %v758
        %v760 = vand.u32 %v379, 4294901760
        %v761 = vsub.f32 %v379, %v760
        %v762 = vand.u32 %v761, 4294901760
        %763 = vmatpush.msra.mxu0 %v762
        %v764 = vand.u32 %v390, 4294901760
        %765 = vmatmul.f32.gmra.mxu0 %v764
        %v766 = vpop.f32.mrf.mxu0
        %v767 = vadd.f32 %v731, %v766
        %768 = vdwg.mxu0
        %769 = vmatpush.msra.mxu0 0.0
        %770 = vmatpush.msra.mxu0 0.0
        %771 = vmatpush.msra.mxu0 0.0
        %772 = vmatpush.msra.mxu0 0.0
        %773 = vmatpush.msra.mxu0 0.0
        %774 = vmatpush.msra.mxu0 0.0
        %775 = vmatpush.msra.mxu0 0.0
        %776 = vmatpush.msra.mxu0 0.0
        %777 = vmatpush.msra.mxu0 0.0
        %778 = vmatpush.msra.mxu0 0.0
        %779 = vmatpush.msra.mxu0 0.0
        %v780 = vand.u32 %v397, 4294901760
        %781 = vmatpush.msra.mxu0 %v780
        %v782 = vand.u32 %v385, 4294901760
        %783 = vmatpush.msra.mxu0 %v782
        %v784 = vand.u32 %v383, 4294901760
        %785 = vmatpush.msra.mxu0 %v784
        %v786 = vand.u32 %v381, 4294901760
        %787 = vmatpush.msra.mxu0 %v786
        %v788 = vand.u32 %v379, 4294901760
        %789 = vmatpush.msra.mxu0 %v788
        %v790 = vand.u32 %v390, 4294901760
        %791 = vmatmul.f32.gmra.mxu0 %v790
        %v792 = vpop.f32.mrf.mxu0
        %v793 = vadd.f32 %v767, %v792
        %794 = vdwg.mxu0
        %v795 = vmax.f32 %v595, 0.0
        %v796 = vmax.f32 %v793, 0.0
        %797 = vst [vmem:[#allocation1] ss:$2 sm:$0xff] %v229
        %v798 = vld.sshfl [vmem:[#allocation1] sm:$0xff pattern:$0x75316420]
        %v799 = vld.sshfl [vmem:[#allocation1 + $0x8] sm:$0xff pattern:$0x75316420]
        %v804 = vrot.slane %v795, 4
        %v805 = vrot.slane %v796, 4
        %v808 = vsel %vm377, %v798, %v804
        %v809 = vsel %vm377, %v799, %v805
        %810 = vst [vmem:[%s225] sm:$0xff] %v808
        %811 = vst [vmem:[%s225 + $0x8] sm:$0xff] %v809
        %812 = vst [vmem:[%s225 + $0x10] sm:$0xf] %v804
        %813 = vst [vmem:[%s225 + $0x18] sm:$0xf] %v805
        %s814 = scalar_lea.vmem %s184, 8 [#allocation2]
        %v815 = vld [vmem:[%s814] sm:$0xff]
        %817 = vst [vmem:[#allocation1] ss:$2 sm:$0xff] %v815
        %v818 = vld.sshfl [vmem:[#allocation1] sm:$0xff pattern:$0x75316420]
        %v819 = vld.sshfl [vmem:[#allocation1 + $0x8] sm:$0xff pattern:$0x75316420]
        %820 = vrot.lane.b32.xlu0 %v818, 17
        %v821 = vpop.permute.xlu0 %820
        %822 = vrot.lane.b32.xlu0 %v819, 17
        %v823 = vpop.permute.xlu0 %822
        %v824 = vsel %vm238, %v821, %v823
        %v827 = vsel %vm238, 0.0, %v821
        %v828 = vmul.f32 %v827, %v248
        %v829 = vmul.f32 %v824, %v249
        %830 = vst [vmem:[#allocation1] ss:$2 sm:$0xff] %v815
        %v831 = vld.sshfl [vmem:[#allocation1] sm:$0xff pattern:$0x75316420]
        %v832 = vld.sshfl [vmem:[#allocation1 + $0x8] sm:$0xff pattern:$0x75316420]
        %833 = vrot.lane.b32.xlu0 %v831, 16
        %v834 = vpop.permute.xlu0 %833
        %835 = vrot.lane.b32.xlu0 %v832, 16
        %v836 = vpop.permute.xlu0 %835
        %v837 = vsel %vm259, %v834, %v836
        %v839 = vsel %vm259, 0.0, %v834
        %840 = vst [vmem:[#allocation1] ss:$2 sm:$0xff] %v815
        %v841 = vld.sshfl [vmem:[#allocation1] sm:$0xff pattern:$0x75316420]
        %v842 = vld.sshfl [vmem:[#allocation1 + $0x8] sm:$0xff pattern:$0x75316420]
        %843 = vrot.lane.b32.xlu0 %v841, 15
        %v844 = vpop.permute.xlu0 %843
        %845 = vrot.lane.b32.xlu0 %v842, 15
        %v846 = vpop.permute.xlu0 %845
        %v847 = vsel %vm270, %v844, %v846
        %v850 = vsel %vm270, 0.0, %v844
        %v851 = vmul.f32 %v850, %v279
        %v852 = vmul.f32 %v847, %v280
        %853 = vst [vmem:[#allocation1] ss:$2 sm:$0xff] %v815
        %v854 = vld.sshfl [vmem:[#allocation1] sm:$0xff pattern:$0x75316420]
        %v855 = vld.sshfl [vmem:[#allocation1 + $0x8] sm:$0xff pattern:$0x75316420]
        %856 = vrot.lane.b32.xlu0 %v854, 1
        %v857 = vpop.permute.xlu0 %856
        %858 = vrot.lane.b32.xlu0 %v855, 1
        %v859 = vpop.permute.xlu0 %858
        %v860 = vsel %vm290, %v857, %v859
        %v863 = vsel %vm290, 0.0, %v857
        %v864 = vmul.f32 %v863, %v248
        %v865 = vmul.f32 %v860, %v249
        %866 = vst [vmem:[#allocation1] ss:$2 sm:$0xff] %v815
        %v867 = vld.sshfl [vmem:[#allocation1] sm:$0xff pattern:$0x75316420]
        %v868 = vld.sshfl [vmem:[#allocation1 + $0x8] sm:$0xff pattern:$0x75316420]
        %869 = vrot.lane.b32.xlu0 %v867, 127
        %v870 = vpop.permute.xlu0 %869
        %871 = vrot.lane.b32.xlu0 %v868, 127
        %v872 = vpop.permute.xlu0 %871
        %v873 = vsel %vm304, %v870, %v872
        %v876 = vsel %vm304, %v872, 0.0
        %v877 = vmul.f32 %v873, %v279
        %v878 = vmul.f32 %v876, %v280
        %879 = vst [vmem:[#allocation1] ss:$2 sm:$0xff] %v815
        %v880 = vld.sshfl [vmem:[#allocation1] sm:$0xff pattern:$0x75316420]
        %v881 = vld.sshfl [vmem:[#allocation1 + $0x8] sm:$0xff pattern:$0x75316420]
        %882 = vrot.lane.b32.xlu0 %v880, 113
        %v883 = vpop.permute.xlu0 %882
        %884 = vrot.lane.b32.xlu0 %v881, 113
        %v885 = vpop.permute.xlu0 %884
        %v886 = vsel %vm318, %v883, %v885
        %v889 = vsel %vm318, %v885, 0.0
        %v890 = vmul.f32 %v886, %v248
        %v891 = vmul.f32 %v889, %v249
        %892 = vst [vmem:[#allocation1] ss:$2 sm:$0xff] %v815
        %v893 = vld.sshfl [vmem:[#allocation1] sm:$0xff pattern:$0x75316420]
        %v894 = vld.sshfl [vmem:[#allocation1 + $0x8] sm:$0xff pattern:$0x75316420]
        %895 = vrot.lane.b32.xlu0 %v893, 112
        %v896 = vpop.permute.xlu0 %895
        %897 = vrot.lane.b32.xlu0 %v894, 112
        %v898 = vpop.permute.xlu0 %897
        %v899 = vsel %vm332, %v896, %v898
        %v901 = vsel %vm332, %v898, 0.0
        %902 = vst [vmem:[#allocation1] ss:$2 sm:$0xff] %v815
        %v903 = vld.sshfl [vmem:[#allocation1] sm:$0xff pattern:$0x75316420]
        %v904 = vld.sshfl [vmem:[#allocation1 + $0x8] sm:$0xff pattern:$0x75316420]
        %905 = vrot.lane.b32.xlu0 %v903, 111
        %v906 = vpop.permute.xlu0 %905
        %907 = vrot.lane.b32.xlu0 %v904, 111
        %v908 = vpop.permute.xlu0 %907
        %v909 = vsel %vm343, %v906, %v908
        %v912 = vsel %vm343, %v908, 0.0
        %v913 = vmul.f32 %v909, %v279
        %v914 = vmul.f32 %v912, %v280
        %v916 = vrot.slane %v839, 4
        %v917 = vrot.slane %v837, 4
        %v922 = vrot.slane %v864, 4
        %v923 = vrot.slane %v865, 4
        %926 = vst [vmem:[#allocation1] ss:$2 sm:$0xff] %v815
        %v927 = vld.sshfl [vmem:[#allocation1] sm:$0xff pattern:$0x75316420]
        %v928 = vld.sshfl [vmem:[#allocation1 + $0x8] sm:$0xff pattern:$0x75316420]
        %v933 = vrot.slane %v877, 4
        %v934 = vrot.slane %v878, 4
        %v938 = vrot.slane %v899, 4
        %v939 = vrot.slane %v901, 4
        %v942 = vsel %vm377, %v828, %v916
        %v943 = vsel %vm377, %v829, %v917
        %v944 = vsel %vm377, %v851, %v922
        %v945 = vsel %vm377, %v852, %v923
        %v946 = vsel %vm377, %v927, %v933
        %v947 = vsel %vm377, %v928, %v934
        %v948 = vsel %vm377, %v890, %v938
        %v949 = vsel %vm377, %v891, %v939
        %v950 = vsel %vm377, %v913, 1.0
        %v951 = vsel %vm377, %v914, 1.0
        %v953 = vsel %vm392, %v950, 0
        %v956 = vsel %vm392, %v951, 0
        %958 = vmatpush.msra.mxu0 0.0
        %959 = vmatpush.msra.mxu0 0.0
        %960 = vmatpush.msra.mxu0 0.0
        %961 = vmatpush.msra.mxu0 0.0
        %962 = vmatpush.msra.mxu0 0.0
        %963 = vmatpush.msra.mxu0 0.0
        %964 = vmatpush.msra.mxu0 0.0
        %965 = vmatpush.msra.mxu0 0.0
        %966 = vmatpush.msra.mxu0 0.0
        %967 = vmatpush.msra.mxu0 0.0
        %968 = vmatpush.msra.mxu0 0.0
        %v969 = vand.u32 %v953, 4294901760
        %970 = vmatpush.msra.mxu0 %v969
        %v971 = vand.u32 %v948, 4294901760
        %972 = vmatpush.msra.mxu0 %v971
        %v973 = vand.u32 %v946, 4294901760
        %974 = vmatpush.msra.mxu0 %v973
        %v975 = vand.u32 %v944, 4294901760
        %976 = vmatpush.msra.mxu0 %v975
        %v977 = vand.u32 %v942, 4294901760
        %978 = vmatpush.msra.mxu0 %v977
        %v979 = vand.u32 %v390, 4294901760
        %v980 = vsub.f32 %v390, %v979
        %v981 = vand.u32 %v980, 4294901760
        %v982 = vsub.f32 %v980, %v981
        %v983 = vand.u32 %v982, 4294901760
        %984 = vmatmul.f32.gmra.mxu0 %v983
        %v985 = vpop.f32.mrf.mxu0
        %v986 = vadd.f32 0.0, %v985
        %987 = vdwg.mxu0
        %988 = vmatpush.msra.mxu0 0.0
        %989 = vmatpush.msra.mxu0 0.0
        %990 = vmatpush.msra.mxu0 0.0
        %991 = vmatpush.msra.mxu0 0.0
        %992 = vmatpush.msra.mxu0 0.0
        %993 = vmatpush.msra.mxu0 0.0
        %994 = vmatpush.msra.mxu0 0.0
        %995 = vmatpush.msra.mxu0 0.0
        %996 = vmatpush.msra.mxu0 0.0
        %997 = vmatpush.msra.mxu0 0.0
        %998 = vmatpush.msra.mxu0 0.0
        %v999 = vand.u32 %v953, 4294901760
        %v1000 = vsub.f32 %v953, %v999
        %v1001 = vand.u32 %v1000, 4294901760
        %v1002 = vsub.f32 %v1000, %v1001
        %v1003 = vand.u32 %v1002, 4294901760
        %1004 = vmatpush.msra.mxu0 %v1003
        %v1005 = vand.u32 %v948, 4294901760
        %v1006 = vsub.f32 %v948, %v1005
        %v1007 = vand.u32 %v1006, 4294901760
        %v1008 = vsub.f32 %v1006, %v1007
        %v1009 = vand.u32 %v1008, 4294901760
        %1010 = vmatpush.msra.mxu0 %v1009
        %v1011 = vand.u32 %v946, 4294901760
        %v1012 = vsub.f32 %v946, %v1011
        %v1013 = vand.u32 %v1012, 4294901760
        %v1014 = vsub.f32 %v1012, %v1013
        %v1015 = vand.u32 %v1014, 4294901760
        %1016 = vmatpush.msra.mxu0 %v1015
        %v1017 = vand.u32 %v944, 4294901760
        %v1018 = vsub.f32 %v944, %v1017
        %v1019 = vand.u32 %v1018, 4294901760
        %v1020 = vsub.f32 %v1018, %v1019
        %v1021 = vand.u32 %v1020, 4294901760
        %1022 = vmatpush.msra.mxu0 %v1021
        %v1023 = vand.u32 %v942, 4294901760
        %v1024 = vsub.f32 %v942, %v1023
        %v1025 = vand.u32 %v1024, 4294901760
        %v1026 = vsub.f32 %v1024, %v1025
        %v1027 = vand.u32 %v1026, 4294901760
        %1028 = vmatpush.msra.mxu0 %v1027
        %v1029 = vand.u32 %v390, 4294901760
        %1030 = vmatmul.f32.gmra.mxu0 %v1029
        %v1031 = vpop.f32.mrf.mxu0
        %v1032 = vadd.f32 %v986, %v1031
        %1033 = vdwg.mxu0
        %1034 = vmatpush.msra.mxu0 0.0
        %1035 = vmatpush.msra.mxu0 0.0
        %1036 = vmatpush.msra.mxu0 0.0
        %1037 = vmatpush.msra.mxu0 0.0
        %1038 = vmatpush.msra.mxu0 0.0
        %1039 = vmatpush.msra.mxu0 0.0
        %1040 = vmatpush.msra.mxu0 0.0
        %1041 = vmatpush.msra.mxu0 0.0
        %1042 = vmatpush.msra.mxu0 0.0
        %1043 = vmatpush.msra.mxu0 0.0
        %1044 = vmatpush.msra.mxu0 0.0
        %v1045 = vand.u32 %v953, 4294901760
        %v1046 = vsub.f32 %v953, %v1045
        %1047 = vmatpush.msra.mxu0 %v1046
        %v1048 = vand.u32 %v948, 4294901760
        %v1049 = vsub.f32 %v948, %v1048
        %1050 = vmatpush.msra.mxu0 %v1049
        %v1051 = vand.u32 %v946, 4294901760
        %v1052 = vsub.f32 %v946, %v1051
        %1053 = vmatpush.msra.mxu0 %v1052
        %v1054 = vand.u32 %v944, 4294901760
        %v1055 = vsub.f32 %v944, %v1054
        %1056 = vmatpush.msra.mxu0 %v1055
        %v1057 = vand.u32 %v942, 4294901760
        %v1058 = vsub.f32 %v942, %v1057
        %1059 = vmatpush.msra.mxu0 %v1058
        %v1060 = vand.u32 %v390, 4294901760
        %v1061 = vsub.f32 %v390, %v1060
        %1062 = vmatmul.f32.gmra.mxu0 %v1061
        %v1063 = vpop.f32.mrf.mxu0
        %v1064 = vadd.f32 %v1032, %v1063
        %1065 = vdwg.mxu0
        %1066 = vmatpush.msra.mxu0 0.0
        %1067 = vmatpush.msra.mxu0 0.0
        %1068 = vmatpush.msra.mxu0 0.0
        %1069 = vmatpush.msra.mxu0 0.0
        %1070 = vmatpush.msra.mxu0 0.0
        %1071 = vmatpush.msra.mxu0 0.0
        %1072 = vmatpush.msra.mxu0 0.0
        %1073 = vmatpush.msra.mxu0 0.0
        %1074 = vmatpush.msra.mxu0 0.0
        %1075 = vmatpush.msra.mxu0 0.0
        %1076 = vmatpush.msra.mxu0 0.0
        %v1077 = vand.u32 %v953, 4294901760
        %1078 = vmatpush.msra.mxu0 %v1077
        %v1079 = vand.u32 %v948, 4294901760
        %1080 = vmatpush.msra.mxu0 %v1079
        %v1081 = vand.u32 %v946, 4294901760
        %1082 = vmatpush.msra.mxu0 %v1081
        %v1083 = vand.u32 %v944, 4294901760
        %1084 = vmatpush.msra.mxu0 %v1083
        %v1085 = vand.u32 %v942, 4294901760
        %1086 = vmatpush.msra.mxu0 %v1085
        %v1087 = vand.u32 %v390, 4294901760
        %v1088 = vsub.f32 %v390, %v1087
        %v1089 = vand.u32 %v1088, 4294901760
        %1090 = vmatmul.f32.gmra.mxu0 %v1089
        %v1091 = vpop.f32.mrf.mxu0
        %v1092 = vadd.f32 %v1064, %v1091
        %1093 = vdwg.mxu0
        %1094 = vmatpush.msra.mxu0 0.0
        %1095 = vmatpush.msra.mxu0 0.0
        %1096 = vmatpush.msra.mxu0 0.0
        %1097 = vmatpush.msra.mxu0 0.0
        %1098 = vmatpush.msra.mxu0 0.0
        %1099 = vmatpush.msra.mxu0 0.0
        %1100 = vmatpush.msra.mxu0 0.0
        %1101 = vmatpush.msra.mxu0 0.0
        %1102 = vmatpush.msra.mxu0 0.0
        %1103 = vmatpush.msra.mxu0 0.0
        %1104 = vmatpush.msra.mxu0 0.0
        %v1105 = vand.u32 %v953, 4294901760
        %v1106 = vsub.f32 %v953, %v1105
        %v1107 = vand.u32 %v1106, 4294901760
        %1108 = vmatpush.msra.mxu0 %v1107
        %v1109 = vand.u32 %v948, 4294901760
        %v1110 = vsub.f32 %v948, %v1109
        %v1111 = vand.u32 %v1110, 4294901760
        %1112 = vmatpush.msra.mxu0 %v1111
        %v1113 = vand.u32 %v946, 4294901760
        %v1114 = vsub.f32 %v946, %v1113
        %v1115 = vand.u32 %v1114, 4294901760
        %1116 = vmatpush.msra.mxu0 %v1115
        %v1117 = vand.u32 %v944, 4294901760
        %v1118 = vsub.f32 %v944, %v1117
        %v1119 = vand.u32 %v1118, 4294901760
        %1120 = vmatpush.msra.mxu0 %v1119
        %v1121 = vand.u32 %v942, 4294901760
        %v1122 = vsub.f32 %v942, %v1121
        %v1123 = vand.u32 %v1122, 4294901760
        %1124 = vmatpush.msra.mxu0 %v1123
        %v1125 = vand.u32 %v390, 4294901760
        %1126 = vmatmul.f32.gmra.mxu0 %v1125
        %v1127 = vpop.f32.mrf.mxu0
        %v1128 = vadd.f32 %v1092, %v1127
        %1129 = vdwg.mxu0
        %1130 = vmatpush.msra.mxu0 0.0
        %1131 = vmatpush.msra.mxu0 0.0
        %1132 = vmatpush.msra.mxu0 0.0
        %1133 = vmatpush.msra.mxu0 0.0
        %1134 = vmatpush.msra.mxu0 0.0
        %1135 = vmatpush.msra.mxu0 0.0
        %1136 = vmatpush.msra.mxu0 0.0
        %1137 = vmatpush.msra.mxu0 0.0
        %1138 = vmatpush.msra.mxu0 0.0
        %1139 = vmatpush.msra.mxu0 0.0
        %1140 = vmatpush.msra.mxu0 0.0
        %v1141 = vand.u32 %v953, 4294901760
        %1142 = vmatpush.msra.mxu0 %v1141
        %v1143 = vand.u32 %v948, 4294901760
        %1144 = vmatpush.msra.mxu0 %v1143
        %v1145 = vand.u32 %v946, 4294901760
        %1146 = vmatpush.msra.mxu0 %v1145
        %v1147 = vand.u32 %v944, 4294901760
        %1148 = vmatpush.msra.mxu0 %v1147
        %v1149 = vand.u32 %v942, 4294901760
        %1150 = vmatpush.msra.mxu0 %v1149
        %v1151 = vand.u32 %v390, 4294901760
        %1152 = vmatmul.f32.gmra.mxu0 %v1151
        %v1153 = vpop.f32.mrf.mxu0
        %v1154 = vadd.f32 %v1128, %v1153
        %1155 = vdwg.mxu0
        %1156 = vmatpush.msra.mxu0 0.0
        %1157 = vmatpush.msra.mxu0 0.0
        %1158 = vmatpush.msra.mxu0 0.0
        %1159 = vmatpush.msra.mxu0 0.0
        %1160 = vmatpush.msra.mxu0 0.0
        %1161 = vmatpush.msra.mxu0 0.0
        %1162 = vmatpush.msra.mxu0 0.0
        %1163 = vmatpush.msra.mxu0 0.0
        %1164 = vmatpush.msra.mxu0 0.0
        %1165 = vmatpush.msra.mxu0 0.0
        %1166 = vmatpush.msra.mxu0 0.0
        %v1167 = vand.u32 %v956, 4294901760
        %1168 = vmatpush.msra.mxu0 %v1167
        %v1169 = vand.u32 %v949, 4294901760
        %1170 = vmatpush.msra.mxu0 %v1169
        %v1171 = vand.u32 %v947, 4294901760
        %1172 = vmatpush.msra.mxu0 %v1171
        %v1173 = vand.u32 %v945, 4294901760
        %1174 = vmatpush.msra.mxu0 %v1173
        %v1175 = vand.u32 %v943, 4294901760
        %1176 = vmatpush.msra.mxu0 %v1175
        %v1177 = vand.u32 %v390, 4294901760
        %v1178 = vsub.f32 %v390, %v1177
        %v1179 = vand.u32 %v1178, 4294901760
        %v1180 = vsub.f32 %v1178, %v1179
        %v1181 = vand.u32 %v1180, 4294901760
        %1182 = vmatmul.f32.gmra.mxu0 %v1181
        %v1183 = vpop.f32.mrf.mxu0
        %v1184 = vadd.f32 0.0, %v1183
        %1185 = vdwg.mxu0
        %1186 = vmatpush.msra.mxu0 0.0
        %1187 = vmatpush.msra.mxu0 0.0
        %1188 = vmatpush.msra.mxu0 0.0
        %1189 = vmatpush.msra.mxu0 0.0
        %1190 = vmatpush.msra.mxu0 0.0
        %1191 = vmatpush.msra.mxu0 0.0
        %1192 = vmatpush.msra.mxu0 0.0
        %1193 = vmatpush.msra.mxu0 0.0
        %1194 = vmatpush.msra.mxu0 0.0
        %1195 = vmatpush.msra.mxu0 0.0
        %1196 = vmatpush.msra.mxu0 0.0
        %v1197 = vand.u32 %v956, 4294901760
        %v1198 = vsub.f32 %v956, %v1197
        %v1199 = vand.u32 %v1198, 4294901760
        %v1200 = vsub.f32 %v1198, %v1199
        %v1201 = vand.u32 %v1200, 4294901760
        %1202 = vmatpush.msra.mxu0 %v1201
        %v1203 = vand.u32 %v949, 4294901760
        %v1204 = vsub.f32 %v949, %v1203
        %v1205 = vand.u32 %v1204, 4294901760
        %v1206 = vsub.f32 %v1204, %v1205
        %v1207 = vand.u32 %v1206, 4294901760
        %1208 = vmatpush.msra.mxu0 %v1207
        %v1209 = vand.u32 %v947, 4294901760
        %v1210 = vsub.f32 %v947, %v1209
        %v1211 = vand.u32 %v1210, 4294901760
        %v1212 = vsub.f32 %v1210, %v1211
        %v1213 = vand.u32 %v1212, 4294901760
        %1214 = vmatpush.msra.mxu0 %v1213
        %v1215 = vand.u32 %v945, 4294901760
        %v1216 = vsub.f32 %v945, %v1215
        %v1217 = vand.u32 %v1216, 4294901760
        %v1218 = vsub.f32 %v1216, %v1217
        %v1219 = vand.u32 %v1218, 4294901760
        %1220 = vmatpush.msra.mxu0 %v1219
        %v1221 = vand.u32 %v943, 4294901760
        %v1222 = vsub.f32 %v943, %v1221
        %v1223 = vand.u32 %v1222, 4294901760
        %v1224 = vsub.f32 %v1222, %v1223
        %v1225 = vand.u32 %v1224, 4294901760
        %1226 = vmatpush.msra.mxu0 %v1225
        %v1227 = vand.u32 %v390, 4294901760
        %1228 = vmatmul.f32.gmra.mxu0 %v1227
        %v1229 = vpop.f32.mrf.mxu0
        %v1230 = vadd.f32 %v1184, %v1229
        %1231 = vdwg.mxu0
        %1232 = vmatpush.msra.mxu0 0.0
        %1233 = vmatpush.msra.mxu0 0.0
        %1234 = vmatpush.msra.mxu0 0.0
        %1235 = vmatpush.msra.mxu0 0.0
        %1236 = vmatpush.msra.mxu0 0.0
        %1237 = vmatpush.msra.mxu0 0.0
        %1238 = vmatpush.msra.mxu0 0.0
        %1239 = vmatpush.msra.mxu0 0.0
        %1240 = vmatpush.msra.mxu0 0.0
        %1241 = vmatpush.msra.mxu0 0.0
        %1242 = vmatpush.msra.mxu0 0.0
        %v1243 = vand.u32 %v956, 4294901760
        %v1244 = vsub.f32 %v956, %v1243
        %1245 = vmatpush.msra.mxu0 %v1244
        %v1246 = vand.u32 %v949, 4294901760
        %v1247 = vsub.f32 %v949, %v1246
        %1248 = vmatpush.msra.mxu0 %v1247
        %v1249 = vand.u32 %v947, 4294901760
        %v1250 = vsub.f32 %v947, %v1249
        %1251 = vmatpush.msra.mxu0 %v1250
        %v1252 = vand.u32 %v945, 4294901760
        %v1253 = vsub.f32 %v945, %v1252
        %1254 = vmatpush.msra.mxu0 %v1253
        %v1255 = vand.u32 %v943, 4294901760
        %v1256 = vsub.f32 %v943, %v1255
        %1257 = vmatpush.msra.mxu0 %v1256
        %v1258 = vand.u32 %v390, 4294901760
        %v1259 = vsub.f32 %v390, %v1258
        %1260 = vmatmul.f32.gmra.mxu0 %v1259
        %v1261 = vpop.f32.mrf.mxu0
        %v1262 = vadd.f32 %v1230, %v1261
        %1263 = vdwg.mxu0
        %1264 = vmatpush.msra.mxu0 0.0
        %1265 = vmatpush.msra.mxu0 0.0
        %1266 = vmatpush.msra.mxu0 0.0
        %1267 = vmatpush.msra.mxu0 0.0
        %1268 = vmatpush.msra.mxu0 0.0
        %1269 = vmatpush.msra.mxu0 0.0
        %1270 = vmatpush.msra.mxu0 0.0
        %1271 = vmatpush.msra.mxu0 0.0
        %1272 = vmatpush.msra.mxu0 0.0
        %1273 = vmatpush.msra.mxu0 0.0
        %1274 = vmatpush.msra.mxu0 0.0
        %v1275 = vand.u32 %v956, 4294901760
        %1276 = vmatpush.msra.mxu0 %v1275
        %v1277 = vand.u32 %v949, 4294901760
        %1278 = vmatpush.msra.mxu0 %v1277
        %v1279 = vand.u32 %v947, 4294901760
        %1280 = vmatpush.msra.mxu0 %v1279
        %v1281 = vand.u32 %v945, 4294901760
        %1282 = vmatpush.msra.mxu0 %v1281
        %v1283 = vand.u32 %v943, 4294901760
        %1284 = vmatpush.msra.mxu0 %v1283
        %v1285 = vand.u32 %v390, 4294901760
        %v1286 = vsub.f32 %v390, %v1285
        %v1287 = vand.u32 %v1286, 4294901760
        %1288 = vmatmul.f32.gmra.mxu0 %v1287
        %v1289 = vpop.f32.mrf.mxu0
        %v1290 = vadd.f32 %v1262, %v1289
        %1291 = vdwg.mxu0
        %1292 = vmatpush.msra.mxu0 0.0
        %1293 = vmatpush.msra.mxu0 0.0
        %1294 = vmatpush.msra.mxu0 0.0
        %1295 = vmatpush.msra.mxu0 0.0
        %1296 = vmatpush.msra.mxu0 0.0
        %1297 = vmatpush.msra.mxu0 0.0
        %1298 = vmatpush.msra.mxu0 0.0
        %1299 = vmatpush.msra.mxu0 0.0
        %1300 = vmatpush.msra.mxu0 0.0
        %1301 = vmatpush.msra.mxu0 0.0
        %1302 = vmatpush.msra.mxu0 0.0
        %v1303 = vand.u32 %v956, 4294901760
        %v1304 = vsub.f32 %v956, %v1303
        %v1305 = vand.u32 %v1304, 4294901760
        %1306 = vmatpush.msra.mxu0 %v1305
        %v1307 = vand.u32 %v949, 4294901760
        %v1308 = vsub.f32 %v949, %v1307
        %v1309 = vand.u32 %v1308, 4294901760
        %1310 = vmatpush.msra.mxu0 %v1309
        %v1311 = vand.u32 %v947, 4294901760
        %v1312 = vsub.f32 %v947, %v1311
        %v1313 = vand.u32 %v1312, 4294901760
        %1314 = vmatpush.msra.mxu0 %v1313
        %v1315 = vand.u32 %v945, 4294901760
        %v1316 = vsub.f32 %v945, %v1315
        %v1317 = vand.u32 %v1316, 4294901760
        %1318 = vmatpush.msra.mxu0 %v1317
        %v1319 = vand.u32 %v943, 4294901760
        %v1320 = vsub.f32 %v943, %v1319
        %v1321 = vand.u32 %v1320, 4294901760
        %1322 = vmatpush.msra.mxu0 %v1321
        %v1323 = vand.u32 %v390, 4294901760
        %1324 = vmatmul.f32.gmra.mxu0 %v1323
        %v1325 = vpop.f32.mrf.mxu0
        %v1326 = vadd.f32 %v1290, %v1325
        %1327 = vdwg.mxu0
        %1328 = vmatpush.msra.mxu0 0.0
        %1329 = vmatpush.msra.mxu0 0.0
        %1330 = vmatpush.msra.mxu0 0.0
        %1331 = vmatpush.msra.mxu0 0.0
        %1332 = vmatpush.msra.mxu0 0.0
        %1333 = vmatpush.msra.mxu0 0.0
        %1334 = vmatpush.msra.mxu0 0.0
        %1335 = vmatpush.msra.mxu0 0.0
        %1336 = vmatpush.msra.mxu0 0.0
        %1337 = vmatpush.msra.mxu0 0.0
        %1338 = vmatpush.msra.mxu0 0.0
        %v1339 = vand.u32 %v956, 4294901760
        %1340 = vmatpush.msra.mxu0 %v1339
        %v1341 = vand.u32 %v949, 4294901760
        %1342 = vmatpush.msra.mxu0 %v1341
        %v1343 = vand.u32 %v947, 4294901760
        %1344 = vmatpush.msra.mxu0 %v1343
        %v1345 = vand.u32 %v945, 4294901760
        %1346 = vmatpush.msra.mxu0 %v1345
        %v1347 = vand.u32 %v943, 4294901760
        %1348 = vmatpush.msra.mxu0 %v1347
        %v1349 = vand.u32 %v390, 4294901760
        %1350 = vmatmul.f32.gmra.mxu0 %v1349
        %v1351 = vpop.f32.mrf.mxu0
        %v1352 = vadd.f32 %v1326, %v1351
        %1353 = vdwg.mxu0
        %v1354 = vmax.f32 %v1154, 0.0
        %v1355 = vmax.f32 %v1352, 0.0
        %1356 = vst [vmem:[#allocation1] ss:$2 sm:$0xff] %v815
        %v1357 = vld.sshfl [vmem:[#allocation1] sm:$0xff pattern:$0x75316420]
        %v1358 = vld.sshfl [vmem:[#allocation1 + $0x8] sm:$0xff pattern:$0x75316420]
        %v1363 = vrot.slane %v1354, 4
        %v1364 = vrot.slane %v1355, 4
        %v1367 = vsel %vm377, %v1357, %v1363
        %v1368 = vsel %vm377, %v1358, %v1364
        %s1369 = scalar_lea.vmem %s225, 32
        %1370 = vst [vmem:[%s1369] sm:$0xff] %v1367
        %1371 = vst [vmem:[%s1369 + $0x8] sm:$0xff] %v1368
        %1372 = vst [vmem:[%s1369 + $0x10] sm:$0xf] %v1363
        %1373 = vst [vmem:[%s1369 + $0x18] sm:$0xf] %v1364
        %s1374 = smul.u32 2, %s18
        %p1375 = scmp.lt.s32.totalorder %s1374, 3
        %s1376 = scalar_select %p1375, %s1374, 3
        %s1377 = smul.addr %s1376, 4
        %s1378 = smul.addr %s1377, 8
        %s1379 = scalar_lea.vmem %s3, %s1378
        // Predicated region
        $region45: #{tpu_custom_call.1} parent=31 // pred_check
          %p1380 = pneg %p104
        $region46: #{tpu_custom_call.1} parent=31 // pred_check_branch
          %1382 = sbr.rel (%p1380) target = $region48
        $region47: #{tpu_custom_call.1} parent=31 // pred_region
          %s1383 = smul.u32 2, %s18
        $region48: #{tpu_custom_call.1} parent=31 // pred_fallthru
          _
      $region32: #{tpu_custom_call.1} parent=5 // pred_fallthru
        _
      %p1384 = scmp.le.s32.totalorder 2, %s13
      // Predicated region
      $region49: #{tpu_custom_call.1} parent=5 // pred_check
        %p1385 = pneg %p1384
      $region50: #{tpu_custom_call.1} parent=5 // pred_check_branch
        %1387 = sbr.rel (%p1385) target = $region52
      $region51: #{tpu_custom_call.1} parent=5 // pred_region
        %s1388 = ssub.s32 %s13, 2
        // Predicated region
        $region53: #{tpu_custom_call.1} parent=51 // pred_check
          %p1389 = pneg %p110
        $region54: #{tpu_custom_call.1} parent=51 // pred_check_branch
          %1391 = sbr.rel (%p1389) target = $region56
        $region55: #{tpu_custom_call.1} parent=51 // pred_region
          %s1392 = smul.u32 2, %s19
          %p1393 = scmp.lt.s32.totalorder %s1392, 3
          %s1394 = scalar_select %p1393, %s1392, 3
          %s1395 = smul.addr %s1394, 4
          %s1396 = smul.addr %s1395, 8
          %s1397 = scalar_lea.vmem %s3, %s1396
        $region56: #{tpu_custom_call.1} parent=51 // pred_fallthru
          _
      $region52: #{tpu_custom_call.1} parent=5 // pred_fallthru
        _
    $region6: #{tpu_custom_call.1} parent=1 // loop_footer
      %s17 = sadd.s32 1, %s13
    $region7: #{tpu_custom_call.1} parent=1 // loop_footer_branch
      %12 = sbr.rel target = $region3
    $region8: #{tpu_custom_call.1} parent=1 // loop_exit
      _
    %1398 = vsyncpa [#allocation3], 1
    %s1399 = scalar_lea.sflag [#allocation3], 1
    %1400 = vsyncpa %s1399, 1
    %1401 = vsyncpa [#allocation5], 1

</llo_original>
